<compile_context>
chip_gen: v7x
topology: tpu7x:2x2x1
jax: 0.10.0
libtpu: 0.0.40
codegen_flags: <defaults>
</compile_context>

<pallas_src>
import functools
import math

import jax
import jax.numpy as jnp
from jax.experimental import pallas as pl
from jax.experimental.pallas import tpu as pltpu


# ----------------------------------------------------------------------------
# Fused Pallas kernel: full looped forward for ONE batch element (grid over B)
# ----------------------------------------------------------------------------
def _fused_looped_kernel(
    zs_ref, w_in_ref, b_in_ref, wpe_ref,
    ln1g_ref, ln1b_ref, wqkv_ref, bqkv_ref, wo_ref, bo_ref,
    ln2g_ref, ln2b_ref, wfc_ref, bfc_ref, wpr_ref, bpr_ref,
    lnfg_ref, lnfb_ref, wout_ref, lr_ref, bout_ref,
    pred_ref,
    *, n_layer, n_loops, n_head, seq, compute_dtype,
):
    T, H = seq, n_head
    E = w_in_ref.shape[1]
    D = E // H
    scale = 1.0 / math.sqrt(D)

    def mm(a, w):
        return jnp.dot(a.astype(compute_dtype), w.astype(compute_dtype),
                       preferred_element_type=jnp.float32)

    def ln(v, g, b):
        mu = jnp.mean(v, axis=-1, keepdims=True)
        var = jnp.mean((v - mu) ** 2, axis=-1, keepdims=True)
        return (v - mu) * jax.lax.rsqrt(var + 1e-5) * g + b

    # ---- hoisted: additive causal bias, shared by every layer / loop iteration ----
    ri = jax.lax.broadcasted_iota(jnp.int32, (T, T), 0)
    ci = jax.lax.broadcasted_iota(jnp.int32, (T, T), 1)
    bias = jnp.where(ci <= ri, 0.0, -1e30).astype(jnp.float32)      # (T, T)
    bias_h = jnp.broadcast_to(bias[None], (H, T, T))                # (H, T, T)

    # ---- hoisted: read_in + lr scaling + positional table (loop-invariant) ----
    lr = lr_ref[0, 0]                                               # SMEM scalar
    embeds = mm(zs_ref[...], w_in_ref[...]) + b_in_ref[...]         # (T, E)
    base = lr * embeds + wpe_ref[...]                               # backbone adds wpe

    lnfg = lnfg_ref[...]
    lnfb = lnfb_ref[...]
    wout = wout_ref[...]                                            # (1, E)
    bout = bout_ref[0, 0]                                           # SMEM scalar

    def layer_body(l, x):
        # --- causal self-attention ---
        h = ln(x, ln1g_ref[l], ln1b_ref[l])                         # (T, E)
        qkv = mm(h, wqkv_ref[l]) + bqkv_ref[l]                      # (T, 3E), one matmul

        def split(col0):                                            # (T,3E) -> (H,T,D)
            return jnp.concatenate(
                [qkv[None, :, col0 + hh * D: col0 + (hh + 1) * D] for hh in range(H)],
                axis=0)

        qh, kh, vh = split(0), split(E), split(2 * E)
        s = jnp.einsum("hqd,hkd->hqk", qh, kh,
                       preferred_element_type=jnp.float32) * scale  # (H, T, T)
        s = s + bias_h
        m = jnp.max(s, axis=-1, keepdims=True)
        p = jnp.exp(s - m)
        p = p / jnp.sum(p, axis=-1, keepdims=True)                  # exact divide
        attn = jnp.einsum("hqk,hkd->hqd", p.astype(compute_dtype),
                          vh.astype(compute_dtype),
                          preferred_element_type=jnp.float32)       # (H, T, D)
        attn2d = jnp.concatenate([attn[hh] for hh in range(H)], axis=-1)  # (T, E)
        x = x + mm(attn2d, wo_ref[l]) + bo_ref[l]                   # single (E,E) matmul

        # --- MLP (4x, GPT-2 tanh GELU) ---
        h2 = ln(x, ln2g_ref[l], ln2b_ref[l])
        m1 = mm(h2, wfc_ref[l]) + bfc_ref[l]
        m1 = 0.5 * m1 * (1.0 + jnp.tanh(
            0.7978845608028654 * (m1 + 0.044715 * m1 ** 3)))
        x = x + mm(m1, wpr_ref[l]) + bpr_ref[l]
        return x

    def loop_body(i, output):
        # loop_func 'z=f(x+z)': backbone(inputs_embeds = output + lr*embeds (+ wpe))
        x = output + base
        x = jax.lax.fori_loop(0, n_layer, layer_body, x)
        x = ln(x, lnfg, lnfb)                                       # final LayerNorm

        # read_out as a VPU lane-reduction; store one (1, T) row per loop iteration.
        pred = jnp.sum(x[None] * wout, axis=-1) + bout              # (1, T)
        pred_ref[pl.ds(i, 1), :] = pred.astype(pred_ref.dtype)
        return x                                                    # recurrent state

    jax.lax.fori_loop(0, n_loops, loop_body, jnp.zeros((T, E), jnp.float32))
    # TODO(synk): the PyTorch print(idx) side effect is intentionally omitted.


# ----------------------------------------------------------------------------
# Parameter init (lane-dense, fused-QKV layouts)
# ----------------------------------------------------------------------------
def init_params(key, n_dims, n_positions, n_embd, n_layer, n_head):
    del n_head  # head split happens on activations; weights stay lane-dense
    freq = 2
    block_size = freq * n_positions + 1
    E, L = n_embd, n_layer
    std = 0.02
    keys = iter(jax.random.split(key, 16))

    def W(shape):
        return (std * jax.random.normal(next(keys), shape)).astype(jnp.float32)

    return {
        "w_in": W((n_dims, E)),
        "b_in": jnp.zeros((1, E), jnp.float32),
        "wpe": W((block_size, E)),
        # per-layer stacked GPT-2 block params; q|k|v fused along the lane axis
        "ln1g": jnp.ones((L, 1, E), jnp.float32),
        "ln1b": jnp.zeros((L, 1, E), jnp.float32),
        "wqkv": W((L, E, 3 * E)),
        "bqkv": jnp.zeros((L, 1, 3 * E), jnp.float32),
        "wo": W((L, E, E)),
        "bo": jnp.zeros((L, 1, E), jnp.float32),
        "ln2g": jnp.ones((L, 1, E), jnp.float32),
        "ln2b": jnp.zeros((L, 1, E), jnp.float32),
        "wfc": W((L, E, 4 * E)),
        "bfc": jnp.zeros((L, 1, 4 * E), jnp.float32),
        "wpr": W((L, 4 * E, E)),
        "bpr": jnp.zeros((L, 1, E), jnp.float32),
        "lnf_g": jnp.ones((1, E), jnp.float32),
        "lnf_b": jnp.zeros((1, E), jnp.float32),
        "w_out": W((1, E)),                              # pred_type='regression'
        "b_out": jnp.zeros((1, 1), jnp.float32),
        "lr": jax.random.uniform(next(keys), (1, 1), jnp.float32),  # nn.Parameter(torch.rand(1))
    }


def combine(xs, ys):
    """[B,n,d],[B,n] -> [B,2n,d]: x rows at even, (y,0,...,0) rows at odd positions."""
    B, n, d = xs.shape
    ys_wide = jnp.concatenate(
        [ys[:, :, None], jnp.zeros((B, n, d - 1), xs.dtype)], axis=2)
    return jnp.stack([xs, ys_wide], axis=2).reshape(B, 2 * n, d)


def _resident_spec(shape):
    zeros = (0,) * len(shape)
    return pl.BlockSpec(shape, lambda b: zeros)


def looped_forward(params, xs, ys, n_loops, n_loop_start=0, n_head=4,
                   compute_dtype=jnp.float32):
    """TransformerModelLRLooped.forward with loop_func='z=f(x+z)', pred_type='regression'."""
    B, n, d_in = xs.shape
    T = 2 * n
    L, E = params["wqkv"].shape[0], params["wqkv"].shape[1]
    assert E % n_head == 0

    zs = combine(xs, ys)                                 # (B, T, d_in) — host-side glue
    wpe = params["wpe"][:T]                              # (T, E); broadcast over batch in-kernel

    weight_args = (
        params["w_in"], params["b_in"], wpe,
        params["ln1g"], params["ln1b"], params["wqkv"], params["bqkv"],
        params["wo"], params["bo"], params["ln2g"], params["ln2b"],
        params["wfc"], params["bfc"], params["wpr"], params["bpr"],
        params["lnf_g"], params["lnf_b"], params["w_out"],
    )
    operand_bytes = sum(int(a.size) * a.dtype.itemsize for a in (zs,) + weight_args)
    vmem_limit = int(min(max(3 * operand_bytes + (8 << 20), 16 << 20), 64 << 20))

    smem_spec = pl.BlockSpec(memory_space=pltpu.MemorySpace.SMEM)
    in_specs = (
        [pl.BlockSpec((None, T, d_in), lambda b: (b, 0, 0))]         # per-batch activations
        + [_resident_spec(w.shape) for w in weight_args]             # VMEM-resident weights
        + [smem_spec, smem_spec]                                     # lr, b_out scalars
    )

    kernel = functools.partial(
        _fused_looped_kernel,
        n_layer=L, n_loops=n_loops, n_head=n_head, seq=T, compute_dtype=compute_dtype,
    )
    preds_all = pl.pallas_call(
        kernel,
        grid=(B,),
        in_specs=in_specs,
        out_specs=pl.BlockSpec((None, n_loops, T), lambda b: (b, 0, 0)),
        out_shape=jax.ShapeDtypeStruct((B, n_loops, T), jnp.float32),
        compiler_params=pltpu.CompilerParams(
            dimension_semantics=("parallel",),
            vmem_limit_bytes=vmem_limit,
        ),
    )(zs, *weight_args, params["lr"], params["b_out"])

    # ind=0, freq=2 even-position pick on the tiny (B, n_loops, T) result stays in
    # plain JAX so the kernel's output store remains dense.
    return [preds_all[:, i, 0::2] for i in range(n_loop_start, n_loops)]


# ----------------------------------------------------------------------------
if __name__ == "__main__":
    key = jax.random.PRNGKey(0)
    kx, ky, kp = jax.random.split(key, 3)

    B, n, d_in = 2, 8, 4              # batch, n_positions, n_dims
    n_embd, n_layer, n_head = 32, 2, 4
    default_n_loops = 2

    xs = jax.random.normal(kx, (B, n, d_in), jnp.float32)
    ys = jax.random.normal(ky, (B, n), jnp.float32)
    params = init_params(kp, d_in, n, n_embd, n_layer, n_head)

    # compute_dtype=jnp.float32 keeps reference-tight numerics at toy size; switch to
    # jnp.bfloat16 on v6e/v7x for realistic E/T (MXU lever per perf review).
    preds = looped_forward(params, xs, ys, n_loops=default_n_loops, n_head=n_head,
                           compute_dtype=jnp.float32)
    preds = [jax.block_until_ready(p) for p in preds]

    assert len(preds) == default_n_loops
    assert all(p.shape == (B, n) for p in preds)
    assert all(bool(jnp.all(jnp.isfinite(p))) for p in preds)
    print("KERNEL_OK")
</pallas_src>

<mosaic_0001>
module attributes {stable_mosaic.version = 11 : i64} {
  func.func @_fused_looped_kernel(%arg0: i32, %arg1: memref<1x16x4xf32, #tpu.memory_space<vmem>>, %arg2: memref<4x32xf32, #tpu.memory_space<vmem>>, %arg3: memref<1x32xf32, #tpu.memory_space<vmem>>, %arg4: memref<16x32xf32, #tpu.memory_space<vmem>>, %arg5: memref<2x1x32xf32, #tpu.memory_space<vmem>>, %arg6: memref<2x1x32xf32, #tpu.memory_space<vmem>>, %arg7: memref<2x32x96xf32, #tpu.memory_space<vmem>>, %arg8: memref<2x1x96xf32, #tpu.memory_space<vmem>>, %arg9: memref<2x32x32xf32, #tpu.memory_space<vmem>>, %arg10: memref<2x1x32xf32, #tpu.memory_space<vmem>>, %arg11: memref<2x1x32xf32, #tpu.memory_space<vmem>>, %arg12: memref<2x1x32xf32, #tpu.memory_space<vmem>>, %arg13: memref<2x32x128xf32, #tpu.memory_space<vmem>>, %arg14: memref<2x1x128xf32, #tpu.memory_space<vmem>>, %arg15: memref<2x128x32xf32, #tpu.memory_space<vmem>>, %arg16: memref<2x1x32xf32, #tpu.memory_space<vmem>>, %arg17: memref<1x32xf32, #tpu.memory_space<vmem>>, %arg18: memref<1x32xf32, #tpu.memory_space<vmem>>, %arg19: memref<1x32xf32, #tpu.memory_space<vmem>>, %arg20: memref<1x1xf32, #tpu.memory_space<smem>>, %arg21: memref<1x1xf32, #tpu.memory_space<smem>>, %arg22: memref<1x2x16xf32, #tpu.memory_space<vmem>>) attributes {dimension_semantics = [#tpu.dimension_semantics<parallel>], iteration_bounds = array<i64: 2>, scalar_prefetch = 0 : i64, scratch_operands = 0 : i64, tpu.core_type = #tpu.core_type<tc>, window_params = [{transform_indices = @transform_0, window_bounds = array<i64: 1, 16, 4>}, {pipeline_mode = #tpu.pipeline_mode<synchronous>, transform_indices = @transform_1, window_bounds = array<i64: 4, 32>}, {pipeline_mode = #tpu.pipeline_mode<synchronous>, transform_indices = @transform_2, window_bounds = array<i64: 1, 32>}, {pipeline_mode = #tpu.pipeline_mode<synchronous>, transform_indices = @transform_3, window_bounds = array<i64: 16, 32>}, {pipeline_mode = #tpu.pipeline_mode<synchronous>, transform_indices = @transform_4, window_bounds = array<i64: 2, 1, 32>}, {pipeline_mode = #tpu.pipeline_mode<synchronous>, transform_indices = @transform_5, window_bounds = array<i64: 2, 1, 32>}, {pipeline_mode = #tpu.pipeline_mode<synchronous>, transform_indices = @transform_6, window_bounds = array<i64: 2, 32, 96>}, {pipeline_mode = #tpu.pipeline_mode<synchronous>, transform_indices = @transform_7, window_bounds = array<i64: 2, 1, 96>}, {pipeline_mode = #tpu.pipeline_mode<synchronous>, transform_indices = @transform_8, window_bounds = array<i64: 2, 32, 32>}, {pipeline_mode = #tpu.pipeline_mode<synchronous>, transform_indices = @transform_9, window_bounds = array<i64: 2, 1, 32>}, {pipeline_mode = #tpu.pipeline_mode<synchronous>, transform_indices = @transform_10, window_bounds = array<i64: 2, 1, 32>}, {pipeline_mode = #tpu.pipeline_mode<synchronous>, transform_indices = @transform_11, window_bounds = array<i64: 2, 1, 32>}, {pipeline_mode = #tpu.pipeline_mode<synchronous>, transform_indices = @transform_12, window_bounds = array<i64: 2, 32, 128>}, {pipeline_mode = #tpu.pipeline_mode<synchronous>, transform_indices = @transform_13, window_bounds = array<i64: 2, 1, 128>}, {pipeline_mode = #tpu.pipeline_mode<synchronous>, transform_indices = @transform_14, window_bounds = array<i64: 2, 128, 32>}, {pipeline_mode = #tpu.pipeline_mode<synchronous>, transform_indices = @transform_15, window_bounds = array<i64: 2, 1, 32>}, {pipeline_mode = #tpu.pipeline_mode<synchronous>, transform_indices = @transform_16, window_bounds = array<i64: 1, 32>}, {pipeline_mode = #tpu.pipeline_mode<synchronous>, transform_indices = @transform_17, window_bounds = array<i64: 1, 32>}, {pipeline_mode = #tpu.pipeline_mode<synchronous>, transform_indices = @transform_18, window_bounds = array<i64: 1, 32>}, {transform_indices = @transform_19, window_bounds = array<i64: 1, 1>}, {transform_indices = @transform_20, window_bounds = array<i64: 1, 1>}, {transform_indices = @transform_21, window_bounds = array<i64: 1, 2, 16>}]} {
    %0 = tpu.iota {dimensions = array<i32: 0>} : vector<16x16xi32>
    %1 = tpu.iota {dimensions = array<i32: 1>} : vector<16x16xi32>
    %2 = arith.cmpi sle, %1, %0 : vector<16x16xi32>
    %cst = arith.constant 0.000000e+00 : f32
    %cst_0 = arith.constant -1.000000e+30 : f32
    %3 = vector.broadcast %cst : f32 to vector<16x16xf32>
    %4 = vector.broadcast %cst_0 : f32 to vector<16x16xf32>
    %5 = arith.select %2, %3, %4 : vector<16x16xi1>, vector<16x16xf32>
    %6 = vector.shape_cast %5 : vector<16x16xf32> to vector<1x16x16xf32>
    %7 = vector.shape_cast %6 : vector<1x16x16xf32> to vector<1x16x16xf32>
    %8 = vector.broadcast %7 : vector<1x16x16xf32> to vector<4x16x16xf32>
    %c0 = arith.constant 0 : index
    %c0_1 = arith.constant 0 : index
    %9 = memref.load %arg20[%c0, %c0_1] : memref<1x1xf32, #tpu.memory_space<smem>>
    %c0_2 = arith.constant 0 : index
    %c0_3 = arith.constant 0 : index
    %c0_4 = arith.constant 0 : index
    %10 = vector.load %arg1[%c0_2, %c0_3, %c0_4] : memref<1x16x4xf32, #tpu.memory_space<vmem>>, vector<1x16x4xf32>
    %11 = vector.shape_cast %10 : vector<1x16x4xf32> to vector<16x4xf32>
    %c0_5 = arith.constant 0 : index
    %c0_6 = arith.constant 0 : index
    %12 = vector.load %arg2[%c0_5, %c0_6] : memref<4x32xf32, #tpu.memory_space<vmem>>, vector<4x32xf32>
    %cst_7 = arith.constant dense<0.000000e+00> : vector<16x32xf32>
    %13 = tpu.matmul %11, %12, %cst_7 {dimension_numbers = #tpu.dot_dimension_numbers<[1], [0], [0], [1], [0, 0, 1, 1], [], []>} : vector<16x4xf32>, vector<4x32xf32>, vector<16x32xf32> -> vector<16x32xf32>
    %c0_8 = arith.constant 0 : index
    %c0_9 = arith.constant 0 : index
    %14 = vector.load %arg3[%c0_8, %c0_9] : memref<1x32xf32, #tpu.memory_space<vmem>>, vector<1x32xf32>
    %15 = vector.broadcast %14 : vector<1x32xf32> to vector<16x32xf32>
    %16 = arith.addf %13, %15 : vector<16x32xf32>
    %17 = vector.broadcast %9 : f32 to vector<16x32xf32>
    %18 = arith.mulf %17, %16 : vector<16x32xf32>
    %c0_10 = arith.constant 0 : index
    %c0_11 = arith.constant 0 : index
    %19 = vector.load %arg4[%c0_10, %c0_11] : memref<16x32xf32, #tpu.memory_space<vmem>>, vector<16x32xf32>
    %20 = arith.addf %18, %19 : vector<16x32xf32>
    %c0_12 = arith.constant 0 : index
    %c0_13 = arith.constant 0 : index
    %21 = vector.load %arg17[%c0_12, %c0_13] : memref<1x32xf32, #tpu.memory_space<vmem>>, vector<1x32xf32>
    %c0_14 = arith.constant 0 : index
    %c0_15 = arith.constant 0 : index
    %22 = vector.load %arg18[%c0_14, %c0_15] : memref<1x32xf32, #tpu.memory_space<vmem>>, vector<1x32xf32>
    %c0_16 = arith.constant 0 : index
    %c0_17 = arith.constant 0 : index
    %23 = vector.load %arg19[%c0_16, %c0_17] : memref<1x32xf32, #tpu.memory_space<vmem>>, vector<1x32xf32>
    %c0_18 = arith.constant 0 : index
    %c0_19 = arith.constant 0 : index
    %24 = memref.load %arg21[%c0_18, %c0_19] : memref<1x1xf32, #tpu.memory_space<smem>>
    %cst_20 = arith.constant 0.000000e+00 : f32
    %25 = vector.broadcast %cst_20 : f32 to vector<16x32xf32>
    %c0_i32 = arith.constant 0 : i32
    %c2_i32 = arith.constant 2 : i32
    %26 = arith.addi %c0_i32, %c2_i32 : i32
    %c1_i32 = arith.constant 1 : i32
    %27 = scf.for %arg23 = %c0_i32 to %26 step %c1_i32 iter_args(%arg24 = %25) -> (vector<16x32xf32>)  : i32 {
      %28 = arith.addf %arg24, %20 : vector<16x32xf32>
      %c0_i32_22 = arith.constant 0 : i32
      %c2_i32_23 = arith.constant 2 : i32
      %29 = arith.addi %c0_i32_22, %c2_i32_23 : i32
      %c1_i32_24 = arith.constant 1 : i32
      %30 = scf.for %arg25 = %c0_i32_22 to %29 step %c1_i32_24 iter_args(%arg26 = %28) -> (vector<16x32xf32>)  : i32 {
        %64 = arith.index_cast %arg25 : i32 to index
        %c0_34 = arith.constant 0 : index
        %c0_35 = arith.constant 0 : index
        %65 = vector.load %arg5[%64, %c0_34, %c0_35] : memref<2x1x32xf32, #tpu.memory_space<vmem>>, vector<1x1x32xf32>
        %66 = vector.shape_cast %65 : vector<1x1x32xf32> to vector<1x32xf32>
        %67 = arith.index_cast %arg25 : i32 to index
        %c0_36 = arith.constant 0 : index
        %c0_37 = arith.constant 0 : index
        %68 = vector.load %arg6[%67, %c0_36, %c0_37] : memref<2x1x32xf32, #tpu.memory_space<vmem>>, vector<1x1x32xf32>
        %69 = vector.shape_cast %68 : vector<1x1x32xf32> to vector<1x32xf32>
        %cst_38 = arith.constant dense<0.000000e+00> : vector<16xf32>
        %70 = vector.multi_reduction <add>, %arg26, %cst_38 [1] : vector<16x32xf32> to vector<16xf32>
        %71 = vector.shape_cast %70 : vector<16xf32> to vector<16x1xf32>
        %cst_39 = arith.constant 3.200000e+01 : f32
        %72 = vector.broadcast %cst_39 : f32 to vector<16x1xf32>
        %73 = arith.divf %71, %72 : vector<16x1xf32>
        %74 = vector.broadcast %73 : vector<16x1xf32> to vector<16x32xf32>
        %75 = arith.subf %arg26, %74 : vector<16x32xf32>
        %76 = arith.mulf %75, %75 : vector<16x32xf32>
        %cst_40 = arith.constant dense<0.000000e+00> : vector<16xf32>
        %77 = vector.multi_reduction <add>, %76, %cst_40 [1] : vector<16x32xf32> to vector<16xf32>
        %78 = vector.shape_cast %77 : vector<16xf32> to vector<16x1xf32>
        %cst_41 = arith.constant 3.200000e+01 : f32
        %79 = vector.broadcast %cst_41 : f32 to vector<16x1xf32>
        %80 = arith.divf %78, %79 : vector<16x1xf32>
        %81 = vector.broadcast %73 : vector<16x1xf32> to vector<16x32xf32>
        %82 = arith.subf %arg26, %81 : vector<16x32xf32>
        %cst_42 = arith.constant 9.99999974E-6 : f32
        %83 = vector.broadcast %cst_42 : f32 to vector<16x1xf32>
        %84 = arith.addf %80, %83 : vector<16x1xf32>
        %85 = math.rsqrt %84 : vector<16x1xf32>
        %86 = vector.broadcast %85 : vector<16x1xf32> to vector<16x32xf32>
        %87 = arith.mulf %82, %86 : vector<16x32xf32>
        %88 = vector.broadcast %66 : vector<1x32xf32> to vector<16x32xf32>
        %89 = arith.mulf %87, %88 : vector<16x32xf32>
        %90 = vector.broadcast %69 : vector<1x32xf32> to vector<16x32xf32>
        %91 = arith.addf %89, %90 : vector<16x32xf32>
        %92 = arith.index_cast %arg25 : i32 to index
        %c0_43 = arith.constant 0 : index
        %c0_44 = arith.constant 0 : index
        %93 = vector.load %arg7[%92, %c0_43, %c0_44] : memref<2x32x96xf32, #tpu.memory_space<vmem>>, vector<1x32x96xf32>
        %94 = vector.shape_cast %93 : vector<1x32x96xf32> to vector<32x96xf32>
        %cst_45 = arith.constant dense<0.000000e+00> : vector<16x96xf32>
        %95 = tpu.matmul %91, %94, %cst_45 {dimension_numbers = #tpu.dot_dimension_numbers<[1], [0], [0], [1], [0, 0, 1, 1], [], []>} : vector<16x32xf32>, vector<32x96xf32>, vector<16x96xf32> -> vector<16x96xf32>
        %96 = arith.index_cast %arg25 : i32 to index
        %c0_46 = arith.constant 0 : index
        %c0_47 = arith.constant 0 : index
        %97 = vector.load %arg8[%96, %c0_46, %c0_47] : memref<2x1x96xf32, #tpu.memory_space<vmem>>, vector<1x1x96xf32>
        %98 = vector.shape_cast %97 : vector<1x1x96xf32> to vector<1x96xf32>
        %99 = vector.broadcast %98 : vector<1x96xf32> to vector<16x96xf32>
        %100 = arith.addf %95, %99 : vector<16x96xf32>
        %101 = vector.extract_strided_slice %100 {offsets = [0, 0], sizes = [16, 8], strides = [1, 1]} : vector<16x96xf32> to vector<16x8xf32>
        %102 = vector.shape_cast %101 : vector<16x8xf32> to vector<1x16x8xf32>
        %103 = vector.extract_strided_slice %100 {offsets = [0, 8], sizes = [16, 8], strides = [1, 1]} : vector<16x96xf32> to vector<16x8xf32>
        %104 = vector.shape_cast %103 : vector<16x8xf32> to vector<1x16x8xf32>
        %105 = vector.extract_strided_slice %100 {offsets = [0, 16], sizes = [16, 8], strides = [1, 1]} : vector<16x96xf32> to vector<16x8xf32>
        %106 = vector.shape_cast %105 : vector<16x8xf32> to vector<1x16x8xf32>
        %107 = vector.extract_strided_slice %100 {offsets = [0, 24], sizes = [16, 8], strides = [1, 1]} : vector<16x96xf32> to vector<16x8xf32>
        %108 = vector.shape_cast %107 : vector<16x8xf32> to vector<1x16x8xf32>
        %109 = tpu.concatenate %102, %104, %106, %108 in 0 : vector<1x16x8xf32>, vector<1x16x8xf32>, vector<1x16x8xf32>, vector<1x16x8xf32> -> vector<4x16x8xf32>
        %110 = vector.extract_strided_slice %100 {offsets = [0, 32], sizes = [16, 8], strides = [1, 1]} : vector<16x96xf32> to vector<16x8xf32>
        %111 = vector.shape_cast %110 : vector<16x8xf32> to vector<1x16x8xf32>
        %112 = vector.extract_strided_slice %100 {offsets = [0, 40], sizes = [16, 8], strides = [1, 1]} : vector<16x96xf32> to vector<16x8xf32>
        %113 = vector.shape_cast %112 : vector<16x8xf32> to vector<1x16x8xf32>
        %114 = vector.extract_strided_slice %100 {offsets = [0, 48], sizes = [16, 8], strides = [1, 1]} : vector<16x96xf32> to vector<16x8xf32>
        %115 = vector.shape_cast %114 : vector<16x8xf32> to vector<1x16x8xf32>
        %116 = vector.extract_strided_slice %100 {offsets = [0, 56], sizes = [16, 8], strides = [1, 1]} : vector<16x96xf32> to vector<16x8xf32>
        %117 = vector.shape_cast %116 : vector<16x8xf32> to vector<1x16x8xf32>
        %118 = tpu.concatenate %111, %113, %115, %117 in 0 : vector<1x16x8xf32>, vector<1x16x8xf32>, vector<1x16x8xf32>, vector<1x16x8xf32> -> vector<4x16x8xf32>
        %119 = vector.extract_strided_slice %100 {offsets = [0, 64], sizes = [16, 8], strides = [1, 1]} : vector<16x96xf32> to vector<16x8xf32>
        %120 = vector.shape_cast %119 : vector<16x8xf32> to vector<1x16x8xf32>
        %121 = vector.extract_strided_slice %100 {offsets = [0, 72], sizes = [16, 8], strides = [1, 1]} : vector<16x96xf32> to vector<16x8xf32>
        %122 = vector.shape_cast %121 : vector<16x8xf32> to vector<1x16x8xf32>
        %123 = vector.extract_strided_slice %100 {offsets = [0, 80], sizes = [16, 8], strides = [1, 1]} : vector<16x96xf32> to vector<16x8xf32>
        %124 = vector.shape_cast %123 : vector<16x8xf32> to vector<1x16x8xf32>
        %125 = vector.extract_strided_slice %100 {offsets = [0, 88], sizes = [16, 8], strides = [1, 1]} : vector<16x96xf32> to vector<16x8xf32>
        %126 = vector.shape_cast %125 : vector<16x8xf32> to vector<1x16x8xf32>
        %127 = tpu.concatenate %120, %122, %124, %126 in 0 : vector<1x16x8xf32>, vector<1x16x8xf32>, vector<1x16x8xf32>, vector<1x16x8xf32> -> vector<4x16x8xf32>
        "tpu.trace_start"() <{level = 10 : i32, message = "hqd,hkd->hqk"}> : () -> ()
        %cst_48 = arith.constant dense<0.000000e+00> : vector<4x16x16xf32>
        %128 = tpu.matmul %109, %118, %cst_48 {dimension_numbers = #tpu.dot_dimension_numbers<[2], [2], [1], [1], [0, 0, 0, 1, 1, 1], [0], [0]>} : vector<4x16x8xf32>, vector<4x16x8xf32>, vector<4x16x16xf32> -> vector<4x16x16xf32>
        "tpu.trace_stop"() : () -> ()
        %cst_49 = arith.constant 0.353553385 : f32
        %129 = vector.broadcast %cst_49 : f32 to vector<4x16x16xf32>
        %130 = arith.mulf %128, %129 : vector<4x16x16xf32>
        %131 = arith.addf %130, %8 : vector<4x16x16xf32>
        %cst_50 = arith.constant dense<0xFF800000> : vector<4x16xf32>
        %132 = vector.multi_reduction <maximumf>, %131, %cst_50 [2] : vector<4x16x16xf32> to vector<4x16xf32>
        %133 = vector.shape_cast %132 : vector<4x16xf32> to vector<4x16x1xf32>
        %134 = vector.broadcast %133 : vector<4x16x1xf32> to vector<4x16x16xf32>
        %135 = arith.subf %131, %134 : vector<4x16x16xf32>
        %136 = math.exp %135 : vector<4x16x16xf32>
        %cst_51 = arith.constant dense<0.000000e+00> : vector<4x16xf32>
        %137 = vector.multi_reduction <add>, %136, %cst_51 [2] : vector<4x16x16xf32> to vector<4x16xf32>
        %138 = vector.shape_cast %137 : vector<4x16xf32> to vector<4x16x1xf32>
        %139 = vector.broadcast %138 : vector<4x16x1xf32> to vector<4x16x16xf32>
        %140 = arith.divf %136, %139 : vector<4x16x16xf32>
        "tpu.trace_start"() <{level = 10 : i32, message = "hqk,hkd->hqd"}> : () -> ()
        %cst_52 = arith.constant dense<0.000000e+00> : vector<4x16x8xf32>
        %141 = tpu.matmul %140, %127, %cst_52 {dimension_numbers = #tpu.dot_dimension_numbers<[2], [1], [1], [2], [0, 0, 0, 1, 1, 2], [0], [0]>} : vector<4x16x16xf32>, vector<4x16x8xf32>, vector<4x16x8xf32> -> vector<4x16x8xf32>
        "tpu.trace_stop"() : () -> ()
        %142 = vector.extract_strided_slice %141 {offsets = [0, 0, 0], sizes = [1, 16, 8], strides = [1, 1, 1]} : vector<4x16x8xf32> to vector<1x16x8xf32>
        %143 = vector.shape_cast %142 : vector<1x16x8xf32> to vector<16x8xf32>
        %144 = vector.extract_strided_slice %141 {offsets = [1, 0, 0], sizes = [1, 16, 8], strides = [1, 1, 1]} : vector<4x16x8xf32> to vector<1x16x8xf32>
        %145 = vector.shape_cast %144 : vector<1x16x8xf32> to vector<16x8xf32>
        %146 = vector.extract_strided_slice %141 {offsets = [2, 0, 0], sizes = [1, 16, 8], strides = [1, 1, 1]} : vector<4x16x8xf32> to vector<1x16x8xf32>
        %147 = vector.shape_cast %146 : vector<1x16x8xf32> to vector<16x8xf32>
        %148 = vector.extract_strided_slice %141 {offsets = [3, 0, 0], sizes = [1, 16, 8], strides = [1, 1, 1]} : vector<4x16x8xf32> to vector<1x16x8xf32>
        %149 = vector.shape_cast %148 : vector<1x16x8xf32> to vector<16x8xf32>
        %150 = tpu.concatenate %143, %145, %147, %149 in 1 : vector<16x8xf32>, vector<16x8xf32>, vector<16x8xf32>, vector<16x8xf32> -> vector<16x32xf32>
        %151 = arith.index_cast %arg25 : i32 to index
        %c0_53 = arith.constant 0 : index
        %c0_54 = arith.constant 0 : index
        %152 = vector.load %arg9[%151, %c0_53, %c0_54] : memref<2x32x32xf32, #tpu.memory_space<vmem>>, vector<1x32x32xf32>
        %153 = vector.shape_cast %152 : vector<1x32x32xf32> to vector<32x32xf32>
        %cst_55 = arith.constant dense<0.000000e+00> : vector<16x32xf32>
        %154 = tpu.matmul %150, %153, %cst_55 {dimension_numbers = #tpu.dot_dimension_numbers<[1], [0], [0], [1], [0, 0, 1, 1], [], []>} : vector<16x32xf32>, vector<32x32xf32>, vector<16x32xf32> -> vector<16x32xf32>
        %155 = arith.addf %arg26, %154 : vector<16x32xf32>
        %156 = arith.index_cast %arg25 : i32 to index
        %c0_56 = arith.constant 0 : index
        %c0_57 = arith.constant 0 : index
        %157 = vector.load %arg10[%156, %c0_56, %c0_57] : memref<2x1x32xf32, #tpu.memory_space<vmem>>, vector<1x1x32xf32>
        %158 = vector.shape_cast %157 : vector<1x1x32xf32> to vector<1x32xf32>
        %159 = vector.broadcast %158 : vector<1x32xf32> to vector<16x32xf32>
        %160 = arith.addf %155, %159 : vector<16x32xf32>
        %161 = arith.index_cast %arg25 : i32 to index
        %c0_58 = arith.constant 0 : index
        %c0_59 = arith.constant 0 : index
        %162 = vector.load %arg11[%161, %c0_58, %c0_59] : memref<2x1x32xf32, #tpu.memory_space<vmem>>, vector<1x1x32xf32>
        %163 = vector.shape_cast %162 : vector<1x1x32xf32> to vector<1x32xf32>
        %164 = arith.index_cast %arg25 : i32 to index
        %c0_60 = arith.constant 0 : index
        %c0_61 = arith.constant 0 : index
        %165 = vector.load %arg12[%164, %c0_60, %c0_61] : memref<2x1x32xf32, #tpu.memory_space<vmem>>, vector<1x1x32xf32>
        %166 = vector.shape_cast %165 : vector<1x1x32xf32> to vector<1x32xf32>
        %cst_62 = arith.constant dense<0.000000e+00> : vector<16xf32>
        %167 = vector.multi_reduction <add>, %160, %cst_62 [1] : vector<16x32xf32> to vector<16xf32>
        %168 = vector.shape_cast %167 : vector<16xf32> to vector<16x1xf32>
        %cst_63 = arith.constant 3.200000e+01 : f32
        %169 = vector.broadcast %cst_63 : f32 to vector<16x1xf32>
        %170 = arith.divf %168, %169 : vector<16x1xf32>
        %171 = vector.broadcast %170 : vector<16x1xf32> to vector<16x32xf32>
        %172 = arith.subf %160, %171 : vector<16x32xf32>
        %173 = arith.mulf %172, %172 : vector<16x32xf32>
        %cst_64 = arith.constant dense<0.000000e+00> : vector<16xf32>
        %174 = vector.multi_reduction <add>, %173, %cst_64 [1] : vector<16x32xf32> to vector<16xf32>
        %175 = vector.shape_cast %174 : vector<16xf32> to vector<16x1xf32>
        %cst_65 = arith.constant 3.200000e+01 : f32
        %176 = vector.broadcast %cst_65 : f32 to vector<16x1xf32>
        %177 = arith.divf %175, %176 : vector<16x1xf32>
        %178 = vector.broadcast %170 : vector<16x1xf32> to vector<16x32xf32>
        %179 = arith.subf %160, %178 : vector<16x32xf32>
        %cst_66 = arith.constant 9.99999974E-6 : f32
        %180 = vector.broadcast %cst_66 : f32 to vector<16x1xf32>
        %181 = arith.addf %177, %180 : vector<16x1xf32>
        %182 = math.rsqrt %181 : vector<16x1xf32>
        %183 = vector.broadcast %182 : vector<16x1xf32> to vector<16x32xf32>
        %184 = arith.mulf %179, %183 : vector<16x32xf32>
        %185 = vector.broadcast %163 : vector<1x32xf32> to vector<16x32xf32>
        %186 = arith.mulf %184, %185 : vector<16x32xf32>
        %187 = vector.broadcast %166 : vector<1x32xf32> to vector<16x32xf32>
        %188 = arith.addf %186, %187 : vector<16x32xf32>
        %189 = arith.index_cast %arg25 : i32 to index
        %c0_67 = arith.constant 0 : index
        %c0_68 = arith.constant 0 : index
        %190 = vector.load %arg13[%189, %c0_67, %c0_68] : memref<2x32x128xf32, #tpu.memory_space<vmem>>, vector<1x32x128xf32>
        %191 = vector.shape_cast %190 : vector<1x32x128xf32> to vector<32x128xf32>
        %cst_69 = arith.constant dense<0.000000e+00> : vector<16x128xf32>
        %192 = tpu.matmul %188, %191, %cst_69 {dimension_numbers = #tpu.dot_dimension_numbers<[1], [0], [0], [1], [0, 0, 1, 1], [], []>} : vector<16x32xf32>, vector<32x128xf32>, vector<16x128xf32> -> vector<16x128xf32>
        %193 = arith.index_cast %arg25 : i32 to index
        %c0_70 = arith.constant 0 : index
        %c0_71 = arith.constant 0 : index
        %194 = vector.load %arg14[%193, %c0_70, %c0_71] : memref<2x1x128xf32, #tpu.memory_space<vmem>>, vector<1x1x128xf32>
        %195 = vector.shape_cast %194 : vector<1x1x128xf32> to vector<1x128xf32>
        %196 = vector.broadcast %195 : vector<1x128xf32> to vector<16x128xf32>
        %197 = arith.addf %192, %196 : vector<16x128xf32>
        %cst_72 = arith.constant 5.000000e-01 : f32
        %198 = vector.broadcast %cst_72 : f32 to vector<16x128xf32>
        %199 = arith.mulf %198, %197 : vector<16x128xf32>
        %200 = arith.mulf %197, %197 : vector<16x128xf32>
        %201 = arith.mulf %197, %200 : vector<16x128xf32>
        %cst_73 = arith.constant 4.471500e-02 : f32
        %202 = vector.broadcast %cst_73 : f32 to vector<16x128xf32>
        %203 = arith.mulf %202, %201 : vector<16x128xf32>
        %204 = arith.addf %197, %203 : vector<16x128xf32>
        %cst_74 = arith.constant 0.797884583 : f32
        %205 = vector.broadcast %cst_74 : f32 to vector<16x128xf32>
        %206 = arith.mulf %205, %204 : vector<16x128xf32>
        %207 = math.tanh %206 : vector<16x128xf32>
        %cst_75 = arith.constant 1.000000e+00 : f32
        %208 = vector.broadcast %cst_75 : f32 to vector<16x128xf32>
        %209 = arith.addf %208, %207 : vector<16x128xf32>
        %210 = arith.mulf %199, %209 : vector<16x128xf32>
        %211 = arith.index_cast %arg25 : i32 to index
        %c0_76 = arith.constant 0 : index
        %c0_77 = arith.constant 0 : index
        %212 = vector.load %arg15[%211, %c0_76, %c0_77] : memref<2x128x32xf32, #tpu.memory_space<vmem>>, vector<1x128x32xf32>
        %213 = vector.shape_cast %212 : vector<1x128x32xf32> to vector<128x32xf32>
        %cst_78 = arith.constant dense<0.000000e+00> : vector<16x32xf32>
        %214 = tpu.matmul %210, %213, %cst_78 {dimension_numbers = #tpu.dot_dimension_numbers<[1], [0], [0], [1], [0, 0, 1, 1], [], []>} : vector<16x128xf32>, vector<128x32xf32>, vector<16x32xf32> -> vector<16x32xf32>
        %215 = arith.addf %160, %214 : vector<16x32xf32>
        %216 = arith.index_cast %arg25 : i32 to index
        %c0_79 = arith.constant 0 : index
        %c0_80 = arith.constant 0 : index
        %217 = vector.load %arg16[%216, %c0_79, %c0_80] : memref<2x1x32xf32, #tpu.memory_space<vmem>>, vector<1x1x32xf32>
        %218 = vector.shape_cast %217 : vector<1x1x32xf32> to vector<1x32xf32>
        %219 = vector.broadcast %218 : vector<1x32xf32> to vector<16x32xf32>
        %220 = arith.addf %215, %219 : vector<16x32xf32>
        scf.yield %220 : vector<16x32xf32>
      }
      %c2_i32_25 = arith.constant 2 : i32
      %cst_26 = arith.constant dense<0.000000e+00> : vector<16xf32>
      %31 = vector.multi_reduction <add>, %30, %cst_26 [1] : vector<16x32xf32> to vector<16xf32>
      %32 = vector.shape_cast %31 : vector<16xf32> to vector<16x1xf32>
      %cst_27 = arith.constant 3.200000e+01 : f32
      %33 = vector.broadcast %cst_27 : f32 to vector<16x1xf32>
      %34 = arith.divf %32, %33 : vector<16x1xf32>
      %35 = vector.broadcast %34 : vector<16x1xf32> to vector<16x32xf32>
      %36 = arith.subf %30, %35 : vector<16x32xf32>
      %37 = arith.mulf %36, %36 : vector<16x32xf32>
      %cst_28 = arith.constant dense<0.000000e+00> : vector<16xf32>
      %38 = vector.multi_reduction <add>, %37, %cst_28 [1] : vector<16x32xf32> to vector<16xf32>
      %39 = vector.shape_cast %38 : vector<16xf32> to vector<16x1xf32>
      %cst_29 = arith.constant 3.200000e+01 : f32
      %40 = vector.broadcast %cst_29 : f32 to vector<16x1xf32>
      %41 = arith.divf %39, %40 : vector<16x1xf32>
      %42 = vector.broadcast %34 : vector<16x1xf32> to vector<16x32xf32>
      %43 = arith.subf %30, %42 : vector<16x32xf32>
      %cst_30 = arith.constant 9.99999974E-6 : f32
      %44 = vector.broadcast %cst_30 : f32 to vector<16x1xf32>
      %45 = arith.addf %41, %44 : vector<16x1xf32>
      %46 = math.rsqrt %45 : vector<16x1xf32>
      %47 = vector.broadcast %46 : vector<16x1xf32> to vector<16x32xf32>
      %48 = arith.mulf %43, %47 : vector<16x32xf32>
      %49 = vector.broadcast %21 : vector<1x32xf32> to vector<16x32xf32>
      %50 = arith.mulf %48, %49 : vector<16x32xf32>
      %51 = vector.broadcast %22 : vector<1x32xf32> to vector<16x32xf32>
      %52 = arith.addf %50, %51 : vector<16x32xf32>
      %53 = vector.shape_cast %52 : vector<16x32xf32> to vector<1x16x32xf32>
      %54 = vector.shape_cast %23 : vector<1x32xf32> to vector<1x1x32xf32>
      %55 = vector.broadcast %54 : vector<1x1x32xf32> to vector<1x16x32xf32>
      %56 = arith.mulf %53, %55 : vector<1x16x32xf32>
      %cst_31 = arith.constant dense<0.000000e+00> : vector<1x16xf32>
      %57 = vector.multi_reduction <add>, %56, %cst_31 [2] : vector<1x16x32xf32> to vector<1x16xf32>
      %58 = vector.broadcast %24 : f32 to vector<1x16xf32>
      %59 = arith.addf %57, %58 : vector<1x16xf32>
      %c0_32 = arith.constant 0 : index
      %60 = arith.index_cast %arg23 : i32 to index
      %c0_33 = arith.constant 0 : index
      %61 = vector.load %arg22[%c0_32, %60, %c0_33] : memref<1x2x16xf32, #tpu.memory_space<vmem>>, vector<1x1x16xf32>
      %62 = vector.shape_cast %61 : vector<1x1x16xf32> to vector<1x16xf32>
      %63 = vector.shape_cast %59 : vector<1x16xf32> to vector<1x1x16xf32>
      tpu.vector_store %arg22[%c0_32, %60, %c0_33], %63 {strides = array<i32>} : memref<1x2x16xf32, #tpu.memory_space<vmem>>, vector<1x1x16xf32>,
      scf.yield %52 : vector<16x32xf32>
    }
    %c2_i32_21 = arith.constant 2 : i32
    return
  }
  func.func @transform_0(%arg0: i32) -> (i32, i32, i32) {
    %c0_i32 = arith.constant 0 : i32
    %c0_i32_0 = arith.constant 0 : i32
    %c0_i32_1 = arith.constant 0 : i32
    return %arg0, %c0_i32, %c0_i32_0 : i32, i32, i32
  }
  func.func @transform_1(%arg0: i32) -> (i32, i32) {
    %c0_i32 = arith.constant 0 : i32
    %c0_i32_0 = arith.constant 0 : i32
    %c0_i32_1 = arith.constant 0 : i32
    return %c0_i32, %c0_i32_0 : i32, i32
  }
  func.func @transform_2(%arg0: i32) -> (i32, i32) {
    %c0_i32 = arith.constant 0 : i32
    %c0_i32_0 = arith.constant 0 : i32
    %c0_i32_1 = arith.constant 0 : i32
    return %c0_i32, %c0_i32_0 : i32, i32
  }
  func.func @transform_3(%arg0: i32) -> (i32, i32) {
    %c0_i32 = arith.constant 0 : i32
    %c0_i32_0 = arith.constant 0 : i32
    %c0_i32_1 = arith.constant 0 : i32
    return %c0_i32, %c0_i32_0 : i32, i32
  }
  func.func @transform_4(%arg0: i32) -> (i32, i32, i32) {
    %c0_i32 = arith.constant 0 : i32
    %c0_i32_0 = arith.constant 0 : i32
    %c0_i32_1 = arith.constant 0 : i32
    %c0_i32_2 = arith.constant 0 : i32
    return %c0_i32, %c0_i32_0, %c0_i32_1 : i32, i32, i32
  }
  func.func @transform_5(%arg0: i32) -> (i32, i32, i32) {
    %c0_i32 = arith.constant 0 : i32
    %c0_i32_0 = arith.constant 0 : i32
    %c0_i32_1 = arith.constant 0 : i32
    %c0_i32_2 = arith.constant 0 : i32
    return %c0_i32, %c0_i32_0, %c0_i32_1 : i32, i32, i32
  }
  func.func @transform_6(%arg0: i32) -> (i32, i32, i32) {
    %c0_i32 = arith.constant 0 : i32
    %c0_i32_0 = arith.constant 0 : i32
    %c0_i32_1 = arith.constant 0 : i32
    %c0_i32_2 = arith.constant 0 : i32
    return %c0_i32, %c0_i32_0, %c0_i32_1 : i32, i32, i32
  }
  func.func @transform_7(%arg0: i32) -> (i32, i32, i32) {
    %c0_i32 = arith.constant 0 : i32
    %c0_i32_0 = arith.constant 0 : i32
    %c0_i32_1 = arith.constant 0 : i32
    %c0_i32_2 = arith.constant 0 : i32
    return %c0_i32, %c0_i32_0, %c0_i32_1 : i32, i32, i32
  }
  func.func @transform_8(%arg0: i32) -> (i32, i32, i32) {
    %c0_i32 = arith.constant 0 : i32
    %c0_i32_0 = arith.constant 0 : i32
    %c0_i32_1 = arith.constant 0 : i32
    %c0_i32_2 = arith.constant 0 : i32
    return %c0_i32, %c0_i32_0, %c0_i32_1 : i32, i32, i32
  }
  func.func @transform_9(%arg0: i32) -> (i32, i32, i32) {
    %c0_i32 = arith.constant 0 : i32
    %c0_i32_0 = arith.constant 0 : i32
    %c0_i32_1 = arith.constant 0 : i32
    %c0_i32_2 = arith.constant 0 : i32
    return %c0_i32, %c0_i32_0, %c0_i32_1 : i32, i32, i32
  }
  func.func @transform_10(%arg0: i32) -> (i32, i32, i32) {
    %c0_i32 = arith.constant 0 : i32
    %c0_i32_0 = arith.constant 0 : i32
    %c0_i32_1 = arith.constant 0 : i32
    %c0_i32_2 = arith.constant 0 : i32
    return %c0_i32, %c0_i32_0, %c0_i32_1 : i32, i32, i32
  }
  func.func @transform_11(%arg0: i32) -> (i32, i32, i32) {
    %c0_i32 = arith.constant 0 : i32
    %c0_i32_0 = arith.constant 0 : i32
    %c0_i32_1 = arith.constant 0 : i32
    %c0_i32_2 = arith.constant 0 : i32
    return %c0_i32, %c0_i32_0, %c0_i32_1 : i32, i32, i32
  }
  func.func @transform_12(%arg0: i32) -> (i32, i32, i32) {
    %c0_i32 = arith.constant 0 : i32
    %c0_i32_0 = arith.constant 0 : i32
    %c0_i32_1 = arith.constant 0 : i32
    %c0_i32_2 = arith.constant 0 : i32
    return %c0_i32, %c0_i32_0, %c0_i32_1 : i32, i32, i32
  }
  func.func @transform_13(%arg0: i32) -> (i32, i32, i32) {
    %c0_i32 = arith.constant 0 : i32
    %c0_i32_0 = arith.constant 0 : i32
    %c0_i32_1 = arith.constant 0 : i32
    %c0_i32_2 = arith.constant 0 : i32
    return %c0_i32, %c0_i32_0, %c0_i32_1 : i32, i32, i32
  }
  func.func @transform_14(%arg0: i32) -> (i32, i32, i32) {
    %c0_i32 = arith.constant 0 : i32
    %c0_i32_0 = arith.constant 0 : i32
    %c0_i32_1 = arith.constant 0 : i32
    %c0_i32_2 = arith.constant 0 : i32
    return %c0_i32, %c0_i32_0, %c0_i32_1 : i32, i32, i32
  }
  func.func @transform_15(%arg0: i32) -> (i32, i32, i32) {
    %c0_i32 = arith.constant 0 : i32
    %c0_i32_0 = arith.constant 0 : i32
    %c0_i32_1 = arith.constant 0 : i32
    %c0_i32_2 = arith.constant 0 : i32
    return %c0_i32, %c0_i32_0, %c0_i32_1 : i32, i32, i32
  }
  func.func @transform_16(%arg0: i32) -> (i32, i32) {
    %c0_i32 = arith.constant 0 : i32
    %c0_i32_0 = arith.constant 0 : i32
    %c0_i32_1 = arith.constant 0 : i32
    return %c0_i32, %c0_i32_0 : i32, i32
  }
  func.func @transform_17(%arg0: i32) -> (i32, i32) {
    %c0_i32 = arith.constant 0 : i32
    %c0_i32_0 = arith.constant 0 : i32
    %c0_i32_1 = arith.constant 0 : i32
    return %c0_i32, %c0_i32_0 : i32, i32
  }
  func.func @transform_18(%arg0: i32) -> (i32, i32) {
    %c0_i32 = arith.constant 0 : i32
    %c0_i32_0 = arith.constant 0 : i32
    %c0_i32_1 = arith.constant 0 : i32
    return %c0_i32, %c0_i32_0 : i32, i32
  }
  func.func @transform_19(%arg0: i32) -> (i32, i32) {
    %c0_i32 = arith.constant 0 : i32
    %c0_i32_0 = arith.constant 0 : i32
    %c0_i32_1 = arith.constant 0 : i32
    return %c0_i32, %c0_i32_0 : i32, i32
  }
  func.func @transform_20(%arg0: i32) -> (i32, i32) {
    %c0_i32 = arith.constant 0 : i32
    %c0_i32_0 = arith.constant 0 : i32
    %c0_i32_1 = arith.constant 0 : i32
    return %c0_i32, %c0_i32_0 : i32, i32
  }
  func.func @transform_21(%arg0: i32) -> (i32, i32, i32) {
    %c0_i32 = arith.constant 0 : i32
    %c0_i32_0 = arith.constant 0 : i32
    %c0_i32_1 = arith.constant 0 : i32
    return %arg0, %c0_i32, %c0_i32_0 : i32, i32, i32
  }
}

</mosaic_0001>

<llo_original>
// kernel: tpu_custom_call.1
$region0: #{tpu_custom_call.1}
  #allocation0 [shape = 'u32[]', space=smem, size = 0x4, offset = 0x4, fixed_abs, tag = 'smem constant byte address 0x4 - core index']
  #allocation1 [shape = 'u32[144,128]{1,0:T(1,128)}', space=vmem, size = 0x12000, scoped, tag = 'internal scratch']
  #allocation2 [shape = 'f32[1,1]{1,0:T(1,128)S(6)}', space=smem, size = 0x200, scoped, tag = 'scoped memory for tpu_custom_call.1']
  #allocation3 [shape = 'f32[1,1]{1,0:T(1,128)S(6)}', space=smem, size = 0x200, scoped, tag = 'scoped memory for tpu_custom_call.1']
  %s0 = inlined_call_operand.vmem [shape: f32[2,16,4], index: 0, kind: input, shape index: {}]
  %s1 = inlined_call_operand.vmem [shape: f32[4,32], index: 1, kind: input, shape index: {}]
  %s2 = inlined_call_operand.vmem [shape: f32[1,32], index: 2, kind: input, shape index: {}]
  %s3 = inlined_call_operand.vmem [shape: f32[16,32], index: 3, kind: input, shape index: {}]
  %s4 = inlined_call_operand.vmem [shape: f32[2,1,32], index: 4, kind: input, shape index: {}]
  %s5 = inlined_call_operand.vmem [shape: f32[2,1,32], index: 5, kind: input, shape index: {}]
  %s6 = inlined_call_operand.vmem [shape: f32[2,32,96], index: 6, kind: input, shape index: {}]
  %s7 = inlined_call_operand.vmem [shape: f32[2,1,96], index: 7, kind: input, shape index: {}]
  %s8 = inlined_call_operand.vmem [shape: f32[2,32,32], index: 8, kind: input, shape index: {}]
  %s9 = inlined_call_operand.vmem [shape: f32[2,1,32], index: 9, kind: input, shape index: {}]
  %s10 = inlined_call_operand.vmem [shape: f32[2,1,32], index: 10, kind: input, shape index: {}]
  %s11 = inlined_call_operand.vmem [shape: f32[2,1,32], index: 11, kind: input, shape index: {}]
  %s12 = inlined_call_operand.vmem [shape: f32[2,32,128], index: 12, kind: input, shape index: {}]
  %s13 = inlined_call_operand.vmem [shape: f32[2,1,128], index: 13, kind: input, shape index: {}]
  %s14 = inlined_call_operand.vmem [shape: f32[2,128,32], index: 14, kind: input, shape index: {}]
  %s15 = inlined_call_operand.vmem [shape: f32[2,1,32], index: 15, kind: input, shape index: {}]
  %s16 = inlined_call_operand.vmem [shape: f32[1,32], index: 16, kind: input, shape index: {}]
  %s17 = inlined_call_operand.vmem [shape: f32[1,32], index: 17, kind: input, shape index: {}]
  %s18 = inlined_call_operand.vmem [shape: f32[1,32], index: 18, kind: input, shape index: {}]
  %s19 = inlined_call_operand.<no memory space> [shape: f32[1,1], index: 19, kind: input, shape index: {}]
  %s20 = inlined_call_operand.<no memory space> [shape: f32[1,1], index: 20, kind: input, shape index: {}]
  %s21 = inlined_call_operand.hbm [shape: f32[2,2,16], index: 21, kind: output, shape index: {}]
  %s22 = sld [smem:[#allocation0]]
  $region131: #{tpu_custom_call.1} parent=0
    _
  %s24 = ssub.s32 1, %s22
  %s25 = scalar_select 0, %s24, %s22
  %26 = sst [smem:[#allocation2]] %s19
  %27 = sst [smem:[#allocation3]] %s20
  $region1: #{tpu_custom_call.1} parent=0
    #allocation4 [shape = 'u8[2048]{0}', space=vmem, size = 0x800, scoped, tag = 'output window, operand 0']
    #allocation5 [shape = 's32[2]{0}', space=sflag, size = 0x8, scoped, tag = 'scoped memory for tpu_custom_call.1']
    %28 = vsyncpa [#allocation5], 0
    %s29 = scalar_lea.sflag [#allocation5], 1
    %30 = vsyncpa %s29, 0
    loop: start=0, step=1, limit=4
    $region2: #{tpu_custom_call.1} parent=1 // loop_pre_header
      _
    $region3: #{tpu_custom_call.1} parent=1 // loop_header
      %s32 = sphi 0, %s36
      %p33 = scmp.ge.s32.totalorder %s32, 4
      %s42 = sphi 0, %s44
      %s45 = sphi 0, %s42
      %s46 = sphi 0, %s45
      %s62 = sphi 0, %s46
      %s66 = sphi 0, %s66
      %s68 = sphi 0, %s66
      %s69 = sphi 0, %s68
      %s83 = sphi 0, %s69
      %s87 = sphi 0, %s87
      %s89 = sphi 0, %s87
      %s90 = sphi 0, %s89
      %s104 = sphi 0, %s90
      %s108 = sphi 0, %s108
      %s110 = sphi 0, %s108
      %s111 = sphi 0, %s110
      %s125 = sphi 0, %s111
      %s129 = sphi 0, %s129
      %s131 = sphi 0, %s129
      %s132 = sphi 0, %s131
      %s146 = sphi 0, %s132
      %s150 = sphi 0, %s150
      %s152 = sphi 0, %s150
      %s153 = sphi 0, %s152
      %s167 = sphi 0, %s153
      %s171 = sphi 0, %s171
      %s173 = sphi 0, %s171
      %s174 = sphi 0, %s173
      %s188 = sphi 0, %s174
      %s192 = sphi 0, %s192
      %s194 = sphi 0, %s192
      %s195 = sphi 0, %s194
      %s209 = sphi 0, %s195
      %s213 = sphi 0, %s213
      %s215 = sphi 0, %s213
      %s216 = sphi 0, %s215
      %s230 = sphi 0, %s216
      %s234 = sphi 0, %s234
      %s236 = sphi 0, %s234
      %s237 = sphi 0, %s236
      %s251 = sphi 0, %s237
      %s255 = sphi 0, %s255
      %s257 = sphi 0, %s255
      %s258 = sphi 0, %s257
      %s272 = sphi 0, %s258
      %s276 = sphi 0, %s276
      %s278 = sphi 0, %s276
      %s279 = sphi 0, %s278
      %s293 = sphi 0, %s279
      %s297 = sphi 0, %s297
      %s299 = sphi 0, %s297
      %s300 = sphi 0, %s299
      %s314 = sphi 0, %s300
      %s318 = sphi 0, %s318
      %s320 = sphi 0, %s318
      %s321 = sphi 0, %s320
      %s335 = sphi 0, %s321
      %s339 = sphi 0, %s339
      %s341 = sphi 0, %s339
      %s342 = sphi 0, %s341
      %s356 = sphi 0, %s342
      %s360 = sphi 0, %s360
      %s362 = sphi 0, %s360
      %s363 = sphi 0, %s362
      %s377 = sphi 0, %s363
      %s381 = sphi 0, %s381
      %s383 = sphi 0, %s381
      %s384 = sphi 0, %s383
      %s398 = sphi 0, %s384
      %s402 = sphi 0, %s402
      %s404 = sphi 0, %s402
      %s405 = sphi 0, %s404
      %s419 = sphi 0, %s405
      %s423 = sphi 0, %s423
      %s425 = sphi 0, %s423
      %s426 = sphi 0, %s425
      %s440 = sphi 0, %s426
      %s444 = sphi 0, %s444
      %s446 = sphi 0, %s444
      %s447 = sphi 0, %s446
      %s461 = sphi 0, %s447
      %s465 = sphi 0, %s465
      %s467 = sphi 0, %s465
      %s468 = sphi 0, %s467
      %s482 = sphi 0, %s468
      %s488 = sphi 0, %s490
      %s491 = sphi 0, %s488
      %s492 = sphi 0, %s491
      %s508 = sphi 0, %s492
    $region4: #{tpu_custom_call.1} parent=1 // loop_header_branch
      %35 = sbr.rel (%p33) target = $region8
    $region5: #{tpu_custom_call.1} parent=1 // loop_body
      %s37 = ssub.s32 %s32, 1
      %s38 = ssub.s32 %s32, 2
      %s39 = sadd.s32 %s32, 1
      %s40 = ssub.s32 %s32, %s39
      %p41 = scmp.eq.s32.totalorder %s40, 0
      %s43 = sadd.s32 %s42, 1
      %s44 = scalar_select %p41, %s42, %s43
      %p47 = pneg %p41
      %p48 = scmp.eq.s32.totalorder %s32, 1
      %p49 = por %p47, %p48
      %p50 = scmp.ne.s32.totalorder %s42, %s45
      %p51 = scmp.eq.s32.totalorder %s32, 0
      %p52 = por %p50, %p51
      %p53 = scmp.ne.s32.totalorder %s42, %s45
      %p54 = scmp.eq.s32.totalorder %s37, 1
      %p55 = por %p53, %p54
      %p56 = scmp.ne.s32.totalorder %s45, %s46
      %p57 = scmp.eq.s32.totalorder %s37, 0
      %p58 = por %p56, %p57
      %p59 = scmp.ne.s32.totalorder %s45, %s46
      %p60 = scmp.eq.s32.totalorder %s38, 1
      %p61 = por %p59, %p60
      %p63 = scmp.ne.s32.totalorder %s46, %s62
      %p64 = scmp.eq.s32.totalorder %s38, 0
      %p65 = por %p63, %p64
      %s67 = sadd.s32 %s66, 1
      %p70 = scmp.eq.s32.totalorder %s32, 1
      %p71 = scmp.ne.s32.totalorder %s66, %s68
      %p72 = scmp.eq.s32.totalorder %s32, 0
      %p73 = por %p71, %p72
      %p74 = scmp.ne.s32.totalorder %s66, %s68
      %p75 = scmp.eq.s32.totalorder %s37, 1
      %p76 = por %p74, %p75
      %p77 = scmp.ne.s32.totalorder %s68, %s69
      %p78 = scmp.eq.s32.totalorder %s37, 0
      %p79 = por %p77, %p78
      %p80 = scmp.ne.s32.totalorder %s68, %s69
      %p81 = scmp.eq.s32.totalorder %s38, 1
      %p82 = por %p80, %p81
      %p84 = scmp.ne.s32.totalorder %s69, %s83
      %p85 = scmp.eq.s32.totalorder %s38, 0
      %p86 = por %p84, %p85
      %s88 = sadd.s32 %s87, 1
      %p91 = scmp.eq.s32.totalorder %s32, 1
      %p92 = scmp.ne.s32.totalorder %s87, %s89
      %p93 = scmp.eq.s32.totalorder %s32, 0
      %p94 = por %p92, %p93
      %p95 = scmp.ne.s32.totalorder %s87, %s89
      %p96 = scmp.eq.s32.totalorder %s37, 1
      %p97 = por %p95, %p96
      %p98 = scmp.ne.s32.totalorder %s89, %s90
      %p99 = scmp.eq.s32.totalorder %s37, 0
      %p100 = por %p98, %p99
      %p101 = scmp.ne.s32.totalorder %s89, %s90
      %p102 = scmp.eq.s32.totalorder %s38, 1
      %p103 = por %p101, %p102
      %p105 = scmp.ne.s32.totalorder %s90, %s104
      %p106 = scmp.eq.s32.totalorder %s38, 0
      %p107 = por %p105, %p106
      %s109 = sadd.s32 %s108, 1
      %p112 = scmp.eq.s32.totalorder %s32, 1
      %p113 = scmp.ne.s32.totalorder %s108, %s110
      %p114 = scmp.eq.s32.totalorder %s32, 0
      %p115 = por %p113, %p114
      %p116 = scmp.ne.s32.totalorder %s108, %s110
      %p117 = scmp.eq.s32.totalorder %s37, 1
      %p118 = por %p116, %p117
      %p119 = scmp.ne.s32.totalorder %s110, %s111
      %p120 = scmp.eq.s32.totalorder %s37, 0
      %p121 = por %p119, %p120
      %p122 = scmp.ne.s32.totalorder %s110, %s111
      %p123 = scmp.eq.s32.totalorder %s38, 1
      %p124 = por %p122, %p123
      %p126 = scmp.ne.s32.totalorder %s111, %s125
      %p127 = scmp.eq.s32.totalorder %s38, 0
      %p128 = por %p126, %p127
      %s130 = sadd.s32 %s129, 1
      %p133 = scmp.eq.s32.totalorder %s32, 1
      %p134 = scmp.ne.s32.totalorder %s129, %s131
      %p135 = scmp.eq.s32.totalorder %s32, 0
      %p136 = por %p134, %p135
      %p137 = scmp.ne.s32.totalorder %s129, %s131
      %p138 = scmp.eq.s32.totalorder %s37, 1
      %p139 = por %p137, %p138
      %p140 = scmp.ne.s32.totalorder %s131, %s132
      %p141 = scmp.eq.s32.totalorder %s37, 0
      %p142 = por %p140, %p141
      %p143 = scmp.ne.s32.totalorder %s131, %s132
      %p144 = scmp.eq.s32.totalorder %s38, 1
      %p145 = por %p143, %p144
      %p147 = scmp.ne.s32.totalorder %s132, %s146
      %p148 = scmp.eq.s32.totalorder %s38, 0
      %p149 = por %p147, %p148
      %s151 = sadd.s32 %s150, 1
      %p154 = scmp.eq.s32.totalorder %s32, 1
      %p155 = scmp.ne.s32.totalorder %s150, %s152
      %p156 = scmp.eq.s32.totalorder %s32, 0
      %p157 = por %p155, %p156
      %p158 = scmp.ne.s32.totalorder %s150, %s152
      %p159 = scmp.eq.s32.totalorder %s37, 1
      %p160 = por %p158, %p159
      %p161 = scmp.ne.s32.totalorder %s152, %s153
      %p162 = scmp.eq.s32.totalorder %s37, 0
      %p163 = por %p161, %p162
      %p164 = scmp.ne.s32.totalorder %s152, %s153
      %p165 = scmp.eq.s32.totalorder %s38, 1
      %p166 = por %p164, %p165
      %p168 = scmp.ne.s32.totalorder %s153, %s167
      %p169 = scmp.eq.s32.totalorder %s38, 0
      %p170 = por %p168, %p169
      %s172 = sadd.s32 %s171, 1
      %p175 = scmp.eq.s32.totalorder %s32, 1
      %p176 = scmp.ne.s32.totalorder %s171, %s173
      %p177 = scmp.eq.s32.totalorder %s32, 0
      %p178 = por %p176, %p177
      %p179 = scmp.ne.s32.totalorder %s171, %s173
      %p180 = scmp.eq.s32.totalorder %s37, 1
      %p181 = por %p179, %p180
      %p182 = scmp.ne.s32.totalorder %s173, %s174
      %p183 = scmp.eq.s32.totalorder %s37, 0
      %p184 = por %p182, %p183
      %p185 = scmp.ne.s32.totalorder %s173, %s174
      %p186 = scmp.eq.s32.totalorder %s38, 1
      %p187 = por %p185, %p186
      %p189 = scmp.ne.s32.totalorder %s174, %s188
      %p190 = scmp.eq.s32.totalorder %s38, 0
      %p191 = por %p189, %p190
      %s193 = sadd.s32 %s192, 1
      %p196 = scmp.eq.s32.totalorder %s32, 1
      %p197 = scmp.ne.s32.totalorder %s192, %s194
      %p198 = scmp.eq.s32.totalorder %s32, 0
      %p199 = por %p197, %p198
      %p200 = scmp.ne.s32.totalorder %s192, %s194
      %p201 = scmp.eq.s32.totalorder %s37, 1
      %p202 = por %p200, %p201
      %p203 = scmp.ne.s32.totalorder %s194, %s195
      %p204 = scmp.eq.s32.totalorder %s37, 0
      %p205 = por %p203, %p204
      %p206 = scmp.ne.s32.totalorder %s194, %s195
      %p207 = scmp.eq.s32.totalorder %s38, 1
      %p208 = por %p206, %p207
      %p210 = scmp.ne.s32.totalorder %s195, %s209
      %p211 = scmp.eq.s32.totalorder %s38, 0
      %p212 = por %p210, %p211
      %s214 = sadd.s32 %s213, 1
      %p217 = scmp.eq.s32.totalorder %s32, 1
      %p218 = scmp.ne.s32.totalorder %s213, %s215
      %p219 = scmp.eq.s32.totalorder %s32, 0
      %p220 = por %p218, %p219
      %p221 = scmp.ne.s32.totalorder %s213, %s215
      %p222 = scmp.eq.s32.totalorder %s37, 1
      %p223 = por %p221, %p222
      %p224 = scmp.ne.s32.totalorder %s215, %s216
      %p225 = scmp.eq.s32.totalorder %s37, 0
      %p226 = por %p224, %p225
      %p227 = scmp.ne.s32.totalorder %s215, %s216
      %p228 = scmp.eq.s32.totalorder %s38, 1
      %p229 = por %p227, %p228
      %p231 = scmp.ne.s32.totalorder %s216, %s230
      %p232 = scmp.eq.s32.totalorder %s38, 0
      %p233 = por %p231, %p232
      %s235 = sadd.s32 %s234, 1
      %p238 = scmp.eq.s32.totalorder %s32, 1
      %p239 = scmp.ne.s32.totalorder %s234, %s236
      %p240 = scmp.eq.s32.totalorder %s32, 0
      %p241 = por %p239, %p240
      %p242 = scmp.ne.s32.totalorder %s234, %s236
      %p243 = scmp.eq.s32.totalorder %s37, 1
      %p244 = por %p242, %p243
      %p245 = scmp.ne.s32.totalorder %s236, %s237
      %p246 = scmp.eq.s32.totalorder %s37, 0
      %p247 = por %p245, %p246
      %p248 = scmp.ne.s32.totalorder %s236, %s237
      %p249 = scmp.eq.s32.totalorder %s38, 1
      %p250 = por %p248, %p249
      %p252 = scmp.ne.s32.totalorder %s237, %s251
      %p253 = scmp.eq.s32.totalorder %s38, 0
      %p254 = por %p252, %p253
      %s256 = sadd.s32 %s255, 1
      %p259 = scmp.eq.s32.totalorder %s32, 1
      %p260 = scmp.ne.s32.totalorder %s255, %s257
      %p261 = scmp.eq.s32.totalorder %s32, 0
      %p262 = por %p260, %p261
      %p263 = scmp.ne.s32.totalorder %s255, %s257
      %p264 = scmp.eq.s32.totalorder %s37, 1
      %p265 = por %p263, %p264
      %p266 = scmp.ne.s32.totalorder %s257, %s258
      %p267 = scmp.eq.s32.totalorder %s37, 0
      %p268 = por %p266, %p267
      %p269 = scmp.ne.s32.totalorder %s257, %s258
      %p270 = scmp.eq.s32.totalorder %s38, 1
      %p271 = por %p269, %p270
      %p273 = scmp.ne.s32.totalorder %s258, %s272
      %p274 = scmp.eq.s32.totalorder %s38, 0
      %p275 = por %p273, %p274
      %s277 = sadd.s32 %s276, 1
      %p280 = scmp.eq.s32.totalorder %s32, 1
      %p281 = scmp.ne.s32.totalorder %s276, %s278
      %p282 = scmp.eq.s32.totalorder %s32, 0
      %p283 = por %p281, %p282
      %p284 = scmp.ne.s32.totalorder %s276, %s278
      %p285 = scmp.eq.s32.totalorder %s37, 1
      %p286 = por %p284, %p285
      %p287 = scmp.ne.s32.totalorder %s278, %s279
      %p288 = scmp.eq.s32.totalorder %s37, 0
      %p289 = por %p287, %p288
      %p290 = scmp.ne.s32.totalorder %s278, %s279
      %p291 = scmp.eq.s32.totalorder %s38, 1
      %p292 = por %p290, %p291
      %p294 = scmp.ne.s32.totalorder %s279, %s293
      %p295 = scmp.eq.s32.totalorder %s38, 0
      %p296 = por %p294, %p295
      %s298 = sadd.s32 %s297, 1
      %p301 = scmp.eq.s32.totalorder %s32, 1
      %p302 = scmp.ne.s32.totalorder %s297, %s299
      %p303 = scmp.eq.s32.totalorder %s32, 0
      %p304 = por %p302, %p303
      %p305 = scmp.ne.s32.totalorder %s297, %s299
      %p306 = scmp.eq.s32.totalorder %s37, 1
      %p307 = por %p305, %p306
      %p308 = scmp.ne.s32.totalorder %s299, %s300
      %p309 = scmp.eq.s32.totalorder %s37, 0
      %p310 = por %p308, %p309
      %p311 = scmp.ne.s32.totalorder %s299, %s300
      %p312 = scmp.eq.s32.totalorder %s38, 1
      %p313 = por %p311, %p312
      %p315 = scmp.ne.s32.totalorder %s300, %s314
      %p316 = scmp.eq.s32.totalorder %s38, 0
      %p317 = por %p315, %p316
      %s319 = sadd.s32 %s318, 1
      %p322 = scmp.eq.s32.totalorder %s32, 1
      %p323 = scmp.ne.s32.totalorder %s318, %s320
      %p324 = scmp.eq.s32.totalorder %s32, 0
      %p325 = por %p323, %p324
      %p326 = scmp.ne.s32.totalorder %s318, %s320
      %p327 = scmp.eq.s32.totalorder %s37, 1
      %p328 = por %p326, %p327
      %p329 = scmp.ne.s32.totalorder %s320, %s321
      %p330 = scmp.eq.s32.totalorder %s37, 0
      %p331 = por %p329, %p330
      %p332 = scmp.ne.s32.totalorder %s320, %s321
      %p333 = scmp.eq.s32.totalorder %s38, 1
      %p334 = por %p332, %p333
      %p336 = scmp.ne.s32.totalorder %s321, %s335
      %p337 = scmp.eq.s32.totalorder %s38, 0
      %p338 = por %p336, %p337
      %s340 = sadd.s32 %s339, 1
      %p343 = scmp.eq.s32.totalorder %s32, 1
      %p344 = scmp.ne.s32.totalorder %s339, %s341
      %p345 = scmp.eq.s32.totalorder %s32, 0
      %p346 = por %p344, %p345
      %p347 = scmp.ne.s32.totalorder %s339, %s341
      %p348 = scmp.eq.s32.totalorder %s37, 1
      %p349 = por %p347, %p348
      %p350 = scmp.ne.s32.totalorder %s341, %s342
      %p351 = scmp.eq.s32.totalorder %s37, 0
      %p352 = por %p350, %p351
      %p353 = scmp.ne.s32.totalorder %s341, %s342
      %p354 = scmp.eq.s32.totalorder %s38, 1
      %p355 = por %p353, %p354
      %p357 = scmp.ne.s32.totalorder %s342, %s356
      %p358 = scmp.eq.s32.totalorder %s38, 0
      %p359 = por %p357, %p358
      %s361 = sadd.s32 %s360, 1
      %p364 = scmp.eq.s32.totalorder %s32, 1
      %p365 = scmp.ne.s32.totalorder %s360, %s362
      %p366 = scmp.eq.s32.totalorder %s32, 0
      %p367 = por %p365, %p366
      %p368 = scmp.ne.s32.totalorder %s360, %s362
      %p369 = scmp.eq.s32.totalorder %s37, 1
      %p370 = por %p368, %p369
      %p371 = scmp.ne.s32.totalorder %s362, %s363
      %p372 = scmp.eq.s32.totalorder %s37, 0
      %p373 = por %p371, %p372
      %p374 = scmp.ne.s32.totalorder %s362, %s363
      %p375 = scmp.eq.s32.totalorder %s38, 1
      %p376 = por %p374, %p375
      %p378 = scmp.ne.s32.totalorder %s363, %s377
      %p379 = scmp.eq.s32.totalorder %s38, 0
      %p380 = por %p378, %p379
      %s382 = sadd.s32 %s381, 1
      %p385 = scmp.eq.s32.totalorder %s32, 1
      %p386 = scmp.ne.s32.totalorder %s381, %s383
      %p387 = scmp.eq.s32.totalorder %s32, 0
      %p388 = por %p386, %p387
      %p389 = scmp.ne.s32.totalorder %s381, %s383
      %p390 = scmp.eq.s32.totalorder %s37, 1
      %p391 = por %p389, %p390
      %p392 = scmp.ne.s32.totalorder %s383, %s384
      %p393 = scmp.eq.s32.totalorder %s37, 0
      %p394 = por %p392, %p393
      %p395 = scmp.ne.s32.totalorder %s383, %s384
      %p396 = scmp.eq.s32.totalorder %s38, 1
      %p397 = por %p395, %p396
      %p399 = scmp.ne.s32.totalorder %s384, %s398
      %p400 = scmp.eq.s32.totalorder %s38, 0
      %p401 = por %p399, %p400
      %s403 = sadd.s32 %s402, 1
      %p406 = scmp.eq.s32.totalorder %s32, 1
      %p407 = scmp.ne.s32.totalorder %s402, %s404
      %p408 = scmp.eq.s32.totalorder %s32, 0
      %p409 = por %p407, %p408
      %p410 = scmp.ne.s32.totalorder %s402, %s404
      %p411 = scmp.eq.s32.totalorder %s37, 1
      %p412 = por %p410, %p411
      %p413 = scmp.ne.s32.totalorder %s404, %s405
      %p414 = scmp.eq.s32.totalorder %s37, 0
      %p415 = por %p413, %p414
      %p416 = scmp.ne.s32.totalorder %s404, %s405
      %p417 = scmp.eq.s32.totalorder %s38, 1
      %p418 = por %p416, %p417
      %p420 = scmp.ne.s32.totalorder %s405, %s419
      %p421 = scmp.eq.s32.totalorder %s38, 0
      %p422 = por %p420, %p421
      %s424 = sadd.s32 %s423, 1
      %p427 = scmp.eq.s32.totalorder %s32, 1
      %p428 = scmp.ne.s32.totalorder %s423, %s425
      %p429 = scmp.eq.s32.totalorder %s32, 0
      %p430 = por %p428, %p429
      %p431 = scmp.ne.s32.totalorder %s423, %s425
      %p432 = scmp.eq.s32.totalorder %s37, 1
      %p433 = por %p431, %p432
      %p434 = scmp.ne.s32.totalorder %s425, %s426
      %p435 = scmp.eq.s32.totalorder %s37, 0
      %p436 = por %p434, %p435
      %p437 = scmp.ne.s32.totalorder %s425, %s426
      %p438 = scmp.eq.s32.totalorder %s38, 1
      %p439 = por %p437, %p438
      %p441 = scmp.ne.s32.totalorder %s426, %s440
      %p442 = scmp.eq.s32.totalorder %s38, 0
      %p443 = por %p441, %p442
      %s445 = sadd.s32 %s444, 1
      %p448 = scmp.eq.s32.totalorder %s32, 1
      %p449 = scmp.ne.s32.totalorder %s444, %s446
      %p450 = scmp.eq.s32.totalorder %s32, 0
      %p451 = por %p449, %p450
      %p452 = scmp.ne.s32.totalorder %s444, %s446
      %p453 = scmp.eq.s32.totalorder %s37, 1
      %p454 = por %p452, %p453
      %p455 = scmp.ne.s32.totalorder %s446, %s447
      %p456 = scmp.eq.s32.totalorder %s37, 0
      %p457 = por %p455, %p456
      %p458 = scmp.ne.s32.totalorder %s446, %s447
      %p459 = scmp.eq.s32.totalorder %s38, 1
      %p460 = por %p458, %p459
      %p462 = scmp.ne.s32.totalorder %s447, %s461
      %p463 = scmp.eq.s32.totalorder %s38, 0
      %p464 = por %p462, %p463
      %s466 = sadd.s32 %s465, 1
      %p469 = scmp.eq.s32.totalorder %s32, 1
      %p470 = scmp.ne.s32.totalorder %s465, %s467
      %p471 = scmp.eq.s32.totalorder %s32, 0
      %p472 = por %p470, %p471
      %p473 = scmp.ne.s32.totalorder %s465, %s467
      %p474 = scmp.eq.s32.totalorder %s37, 1
      %p475 = por %p473, %p474
      %p476 = scmp.ne.s32.totalorder %s467, %s468
      %p477 = scmp.eq.s32.totalorder %s37, 0
      %p478 = por %p476, %p477
      %p479 = scmp.ne.s32.totalorder %s467, %s468
      %p480 = scmp.eq.s32.totalorder %s38, 1
      %p481 = por %p479, %p480
      %p483 = scmp.ne.s32.totalorder %s468, %s482
      %p484 = scmp.eq.s32.totalorder %s38, 0
      %p485 = por %p483, %p484
      %s486 = ssub.s32 %s32, %s39
      %p487 = scmp.eq.s32.totalorder %s486, 0
      %s489 = sadd.s32 %s488, 1
      %s490 = scalar_select %p487, %s488, %s489
      %p493 = pneg %p487
      %p494 = scmp.eq.s32.totalorder %s32, 1
      %p495 = por %p493, %p494
      %p496 = scmp.ne.s32.totalorder %s488, %s491
      %p497 = scmp.eq.s32.totalorder %s32, 0
      %p498 = por %p496, %p497
      %p499 = scmp.ne.s32.totalorder %s488, %s491
      %p500 = scmp.eq.s32.totalorder %s37, 1
      %p501 = por %p499, %p500
      %p502 = scmp.ne.s32.totalorder %s491, %s492
      %p503 = scmp.eq.s32.totalorder %s37, 0
      %p504 = por %p502, %p503
      %p505 = scmp.ne.s32.totalorder %s491, %s492
      %p506 = scmp.eq.s32.totalorder %s38, 1
      %p507 = por %p505, %p506
      %p509 = scmp.ne.s32.totalorder %s492, %s508
      %p510 = scmp.eq.s32.totalorder %s38, 0
      %p511 = por %p509, %p510
      %p512 = scmp.le.s32.totalorder 1, %s32
      %p513 = scmp.lt.s32.totalorder %s32, 3
      %p514 = pnand %p512, %p513
      %p515 = pneg %p514
      // Predicated region
      $region9: #{tpu_custom_call.1} parent=5 // pred_check
        _
      $region10: #{tpu_custom_call.1} parent=5 // pred_check_branch
        %517 = sbr.rel (%p514) target = $region12
      $region11: #{tpu_custom_call.1} parent=5 // pred_region
        %s518 = ssub.s32 %s32, 1
        // Predicated region
        $region13: #{tpu_custom_call.1} parent=11 // pred_check
          %p519 = pneg %p79
        $region14: #{tpu_custom_call.1} parent=11 // pred_check_branch
          %521 = sbr.rel (%p519) target = $region16
        $region15: #{tpu_custom_call.1} parent=11 // pred_region
          _
        $region16: #{tpu_custom_call.1} parent=11 // pred_fallthru
          _
        // Predicated region
        $region17: #{tpu_custom_call.1} parent=11 // pred_check
          %p522 = pneg %p100
        $region18: #{tpu_custom_call.1} parent=11 // pred_check_branch
          %524 = sbr.rel (%p522) target = $region20
        $region19: #{tpu_custom_call.1} parent=11 // pred_region
          _
        $region20: #{tpu_custom_call.1} parent=11 // pred_fallthru
          _
        // Predicated region
        $region21: #{tpu_custom_call.1} parent=11 // pred_check
          %p525 = pneg %p121
        $region22: #{tpu_custom_call.1} parent=11 // pred_check_branch
          %527 = sbr.rel (%p525) target = $region24
        $region23: #{tpu_custom_call.1} parent=11 // pred_region
          _
        $region24: #{tpu_custom_call.1} parent=11 // pred_fallthru
          _
        // Predicated region
        $region25: #{tpu_custom_call.1} parent=11 // pred_check
          %p528 = pneg %p142
        $region26: #{tpu_custom_call.1} parent=11 // pred_check_branch
          %530 = sbr.rel (%p528) target = $region28
        $region27: #{tpu_custom_call.1} parent=11 // pred_region
          _
        $region28: #{tpu_custom_call.1} parent=11 // pred_fallthru
          _
        // Predicated region
        $region29: #{tpu_custom_call.1} parent=11 // pred_check
          %p531 = pneg %p163
        $region30: #{tpu_custom_call.1} parent=11 // pred_check_branch
          %533 = sbr.rel (%p531) target = $region32
        $region31: #{tpu_custom_call.1} parent=11 // pred_region
          _
        $region32: #{tpu_custom_call.1} parent=11 // pred_fallthru
          _
        // Predicated region
        $region33: #{tpu_custom_call.1} parent=11 // pred_check
          %p534 = pneg %p184
        $region34: #{tpu_custom_call.1} parent=11 // pred_check_branch
          %536 = sbr.rel (%p534) target = $region36
        $region35: #{tpu_custom_call.1} parent=11 // pred_region
          _
        $region36: #{tpu_custom_call.1} parent=11 // pred_fallthru
          _
        // Predicated region
        $region37: #{tpu_custom_call.1} parent=11 // pred_check
          %p537 = pneg %p205
        $region38: #{tpu_custom_call.1} parent=11 // pred_check_branch
          %539 = sbr.rel (%p537) target = $region40
        $region39: #{tpu_custom_call.1} parent=11 // pred_region
          _
        $region40: #{tpu_custom_call.1} parent=11 // pred_fallthru
          _
        // Predicated region
        $region41: #{tpu_custom_call.1} parent=11 // pred_check
          %p540 = pneg %p226
        $region42: #{tpu_custom_call.1} parent=11 // pred_check_branch
          %542 = sbr.rel (%p540) target = $region44
        $region43: #{tpu_custom_call.1} parent=11 // pred_region
          _
        $region44: #{tpu_custom_call.1} parent=11 // pred_fallthru
          _
        // Predicated region
        $region45: #{tpu_custom_call.1} parent=11 // pred_check
          %p543 = pneg %p247
        $region46: #{tpu_custom_call.1} parent=11 // pred_check_branch
          %545 = sbr.rel (%p543) target = $region48
        $region47: #{tpu_custom_call.1} parent=11 // pred_region
          _
        $region48: #{tpu_custom_call.1} parent=11 // pred_fallthru
          _
        // Predicated region
        $region49: #{tpu_custom_call.1} parent=11 // pred_check
          %p546 = pneg %p268
        $region50: #{tpu_custom_call.1} parent=11 // pred_check_branch
          %548 = sbr.rel (%p546) target = $region52
        $region51: #{tpu_custom_call.1} parent=11 // pred_region
          _
        $region52: #{tpu_custom_call.1} parent=11 // pred_fallthru
          _
        // Predicated region
        $region53: #{tpu_custom_call.1} parent=11 // pred_check
          %p549 = pneg %p289
        $region54: #{tpu_custom_call.1} parent=11 // pred_check_branch
          %551 = sbr.rel (%p549) target = $region56
        $region55: #{tpu_custom_call.1} parent=11 // pred_region
          _
        $region56: #{tpu_custom_call.1} parent=11 // pred_fallthru
          _
        // Predicated region
        $region57: #{tpu_custom_call.1} parent=11 // pred_check
          %p552 = pneg %p310
        $region58: #{tpu_custom_call.1} parent=11 // pred_check_branch
          %554 = sbr.rel (%p552) target = $region60
        $region59: #{tpu_custom_call.1} parent=11 // pred_region
          _
        $region60: #{tpu_custom_call.1} parent=11 // pred_fallthru
          _
        // Predicated region
        $region61: #{tpu_custom_call.1} parent=11 // pred_check
          %p555 = pneg %p331
        $region62: #{tpu_custom_call.1} parent=11 // pred_check_branch
          %557 = sbr.rel (%p555) target = $region64
        $region63: #{tpu_custom_call.1} parent=11 // pred_region
          _
        $region64: #{tpu_custom_call.1} parent=11 // pred_fallthru
          _
        // Predicated region
        $region65: #{tpu_custom_call.1} parent=11 // pred_check
          %p558 = pneg %p352
        $region66: #{tpu_custom_call.1} parent=11 // pred_check_branch
          %560 = sbr.rel (%p558) target = $region68
        $region67: #{tpu_custom_call.1} parent=11 // pred_region
          _
        $region68: #{tpu_custom_call.1} parent=11 // pred_fallthru
          _
        // Predicated region
        $region69: #{tpu_custom_call.1} parent=11 // pred_check
          %p561 = pneg %p373
        $region70: #{tpu_custom_call.1} parent=11 // pred_check_branch
          %563 = sbr.rel (%p561) target = $region72
        $region71: #{tpu_custom_call.1} parent=11 // pred_region
          _
        $region72: #{tpu_custom_call.1} parent=11 // pred_fallthru
          _
        // Predicated region
        $region73: #{tpu_custom_call.1} parent=11 // pred_check
          %p564 = pneg %p394
        $region74: #{tpu_custom_call.1} parent=11 // pred_check_branch
          %566 = sbr.rel (%p564) target = $region76
        $region75: #{tpu_custom_call.1} parent=11 // pred_region
          _
        $region76: #{tpu_custom_call.1} parent=11 // pred_fallthru
          _
        // Predicated region
        $region77: #{tpu_custom_call.1} parent=11 // pred_check
          %p567 = pneg %p415
        $region78: #{tpu_custom_call.1} parent=11 // pred_check_branch
          %569 = sbr.rel (%p567) target = $region80
        $region79: #{tpu_custom_call.1} parent=11 // pred_region
          _
        $region80: #{tpu_custom_call.1} parent=11 // pred_fallthru
          _
        // Predicated region
        $region81: #{tpu_custom_call.1} parent=11 // pred_check
          %p570 = pneg %p436
        $region82: #{tpu_custom_call.1} parent=11 // pred_check_branch
          %572 = sbr.rel (%p570) target = $region84
        $region83: #{tpu_custom_call.1} parent=11 // pred_region
          _
        $region84: #{tpu_custom_call.1} parent=11 // pred_fallthru
          _
        // Predicated region
        $region85: #{tpu_custom_call.1} parent=11 // pred_check
          %p573 = pneg %p457
        $region86: #{tpu_custom_call.1} parent=11 // pred_check_branch
          %575 = sbr.rel (%p573) target = $region88
        $region87: #{tpu_custom_call.1} parent=11 // pred_region
          _
        $region88: #{tpu_custom_call.1} parent=11 // pred_fallthru
          _
        // Predicated region
        $region89: #{tpu_custom_call.1} parent=11 // pred_check
          %p576 = pneg %p478
        $region90: #{tpu_custom_call.1} parent=11 // pred_check_branch
          %578 = sbr.rel (%p576) target = $region92
        $region91: #{tpu_custom_call.1} parent=11 // pred_region
          _
        $region92: #{tpu_custom_call.1} parent=11 // pred_fallthru
          _
      $region12: #{tpu_custom_call.1} parent=5 // pred_fallthru
        _
      %p579 = scmp.lt.s32.totalorder %s32, 2
      // Predicated region
      $region93: #{tpu_custom_call.1} parent=5 // pred_check
        %p580 = pneg %p579
      $region94: #{tpu_custom_call.1} parent=5 // pred_check_branch
        %582 = sbr.rel (%p580) target = $region96
      $region95: #{tpu_custom_call.1} parent=5 // pred_region
        // Predicated region
        $region97: #{tpu_custom_call.1} parent=95 // pred_check
          %p583 = pneg %p52
        $region98: #{tpu_custom_call.1} parent=95 // pred_check_branch
          %585 = sbr.rel (%p583) target = $region100
        $region99: #{tpu_custom_call.1} parent=95 // pred_region
          %p586 = scmp.lt.s32.totalorder %s32, 1
          %s587 = scalar_select %p586, %s32, 1
          %s588 = smul.addr %s587, 2
          %s589 = smul.addr %s588, 8
          %s590 = scalar_lea.vmem %s0, %s589
        $region100: #{tpu_custom_call.1} parent=95 // pred_fallthru
          _
      $region96: #{tpu_custom_call.1} parent=5 // pred_fallthru
        _
      %p591 = scmp.le.s32.totalorder 1, %s32
      %p592 = scmp.lt.s32.totalorder %s32, 3
      %p593 = pnand %p591, %p592
      %p594 = pneg %p593
      // Predicated region
      $region101: #{tpu_custom_call.1} parent=5 // pred_check
        _
      $region102: #{tpu_custom_call.1} parent=5 // pred_check_branch
        %596 = sbr.rel (%p593) target = $region104
      $region103: #{tpu_custom_call.1} parent=5 // pred_region
        %s597 = ssub.s32 %s32, 1
        %p598 = scmp.lt.s32.totalorder %s37, 1
        %s599 = scalar_select %p598, %s37, 1
        %s600 = smul.addr %s599, 2
        %s601 = smul.addr %s600, 8
        %s602 = scalar_lea.vmem %s0, %s601
        %p603 = pneg %p58
        %p604 = pneg %p55
        %p605 = pneg %p79
        %p606 = pneg %p76
        %p607 = pneg %p100
        %p608 = pneg %p97
        %p609 = pneg %p121
        %p610 = pneg %p118
        %p611 = pneg %p142
        %p612 = pneg %p139
        %p613 = pneg %p163
        %p614 = pneg %p160
        %p615 = pneg %p184
        %p616 = pneg %p181
        %p617 = pneg %p205
        %p618 = pneg %p202
        %p619 = pneg %p226
        %p620 = pneg %p223
        %p621 = pneg %p247
        %p622 = pneg %p244
        %p623 = pneg %p268
        %p624 = pneg %p265
        %p625 = pneg %p289
        %p626 = pneg %p286
        %p627 = pneg %p310
        %p628 = pneg %p307
        %p629 = pneg %p331
        %p630 = pneg %p328
        %p631 = pneg %p352
        %p632 = pneg %p349
        %p633 = pneg %p373
        %p634 = pneg %p370
        %p635 = pneg %p394
        %p636 = pneg %p391
        %p637 = pneg %p415
        %p638 = pneg %p412
        %p639 = pneg %p436
        %p640 = pneg %p433
        %p641 = pneg %p457
        %p642 = pneg %p454
        %p643 = pneg %p478
        %p644 = pneg %p475
        %p645 = pneg %p504
        %p646 = pneg %p501
        %s647 = sand.u32 %s491, 1
        %s648 = scalar_lea.sflag [#allocation5], %s647
        %s649 = sand.u32 %s491, 1
        %s650 = smul.addr %s649, 2
        %s651 = scalar_lea.vmem [#allocation4], %s650
        %p652 = scmp.lt.s32.totalorder %s37, 1
        %s653 = scalar_select %p652, %s37, 1
        %s654 = smul.addr %s653, 2
        %s655 = smul.addr %s654, 8
        %s656 = scalar_lea.vmem %s0, %s655
        %v657 = vlaneseq
        %v658 = vshrl.u32 %v657, 7
        %v659 = vadd.s32 %v658, 8
        %v660 = vlaneseq
        %v661 = vand.u32 %v660, 127
        %vm662 = vcmp.le.s32.totalorder %v661, %v658
        %vm663 = vcmp.le.s32.totalorder %v661, %v659
        %v664 = vsel %vm662, 0.0, -1e+30
        %v665 = vsel %vm663, 0.0, -1e+30
        %s666 = sld [smem:[#allocation2]]
        %v667 = vld [vmem:[%s656] sm:$0xff]
        %v668 = vld [vmem:[%s656 + $0x8] sm:$0xff]
        %v669 = vld [vmem:[%s1] sm:$0xf]
        %v670 = vld [vmem:[%s2] sm:$0x1]
        %v672 = vlaneseq
        %v673 = vshrl.u32 %v672, 7
        %v674 = vsub.s32 0, %v673
        %v675 = vrot.slane %v670, %v674
        %vm677 = vcmask 31744
        %v679 = vsel %vm677, %v667, 0
        %v682 = vsel %vm677, %v668, 0
        %vm684 = vcmask 1043456
        %v686 = vsel %vm684, %v669, 0
        %688 = vmatprep.subr.mxu0 0.0
        %689 = vmatpush1.msra.mxu0 %v686
        %690 = vmatprep.subr.mxu0 0.0
        %691 = vmatpush1.msra.mxu0 0.0
        %692 = vmatprep.subr.mxu0 0.0
        %693 = vmatpush1.msra.mxu0 0.0
        %694 = vmatprep.subr.mxu0 0.0
        %695 = vmatpush1.msra.mxu0 0.0
        %696 = vmatprep.subr.mxu0 0.0
        %697 = vmatpush1.msra.mxu0 0.0
        %698 = vmatprep.subr.mxu0 0.0
        %699 = vmatpush1.msra.mxu0 0.0
        %700 = vmatprep.subr.mxu0 0.0
        %701 = vmatpush1.msra.mxu0 0.0
        %702 = vmatprep.subr.mxu0 0.0
        %703 = vmatpush1.msra.mxu0 0.0
        %704 = vmatprep.subr.mxu0 0.0
        %705 = vmatpush1.msra.mxu0 0.0
        %706 = vmatprep.subr.mxu0 0.0
        %707 = vmatpush1.msra.mxu0 0.0
        %708 = vmatprep.subr.mxu0 0.0
        %709 = vmatpush1.msra.mxu0 0.0
        %710 = vmatprep.subr.mxu0 0.0
        %711 = vmatpush1.msra.mxu0 0.0
        %712 = vmatprep.subr.mxu0 0.0
        %713 = vmatpush1.msra.mxu0 0.0
        %714 = vmatprep.subr.mxu0 0.0
        %715 = vmatpush1.msra.mxu0 0.0
        %716 = vmatprep.subr.mxu0 0.0
        %717 = vmatpush1.msra.mxu0 0.0
        %718 = vmatprep.subr.mxu0 0.0
        %719 = vmatpush1.msra.mxu0 0.0
        %720 = vmatprep.subr.mxu0 0.0
        %721 = vmatpush1.msra.mxu0 0.0
        %722 = vmatprep.subr.mxu0 0.0
        %723 = vmatpush1.msra.mxu0 0.0
        %724 = vmatprep.subr.mxu0 0.0
        %725 = vmatpush1.msra.mxu0 0.0
        %726 = vmatprep.subr.mxu0 0.0
        %727 = vmatpush1.msra.mxu0 0.0
        %728 = vmatprep.subr.mxu0 0.0
        %729 = vmatpush1.msra.mxu0 0.0
        %730 = vmatprep.subr.mxu0 0.0
        %731 = vmatpush1.msra.mxu0 0.0
        %732 = vmatprep.subr.mxu0 0.0
        %733 = vmatpush1.msra.mxu0 0.0
        %734 = vmatprep.subr.mxu0 0.0
        %735 = vmatpush1.msra.mxu0 0.0
        %736 = vmatprep.subr.mxu0 0.0
        %737 = vmatpush1.msra.mxu0 0.0
        %738 = vmatprep.subr.mxu0 0.0
        %739 = vmatpush1.msra.mxu0 0.0
        %740 = vmatprep.subr.mxu0 0.0
        %741 = vmatpush1.msra.mxu0 0.0
        %742 = vmatprep.subr.mxu0 0.0
        %743 = vmatpush1.msra.mxu0 0.0
        %744 = vmatprep.subr.mxu0 0.0
        %745 = vmatpush1.msra.mxu0 0.0
        %746 = vmatprep.subr.mxu0 0.0
        %747 = vmatpush1.msra.mxu0 0.0
        %748 = vmatprep.subr.mxu0 0.0
        %749 = vmatpush1.msra.mxu0 0.0
        %750 = vmatprep.subr.mxu0 0.0
        %751 = vmatpush1.msra.mxu0 0.0
        %752 = vmatprep.mubr.f32.mxu0 0.0
        %753 = vmatmul.mubr.f32.gmra.mrb[0].mxu0 %v679
        %v754 = vpop.f32.mrb[0].mxu0
        %v755 = vadd.f32 %v675, %v754
        %v756 = vpop.f32.mrb[0].mxu0
        %757 = vmatprep.mubr.f32.mxu0 0.0
        %758 = vmatmul.mubr.f32.gmra.mrb[0].mxu0 %v682
        %v759 = vpop.f32.mrb[0].mxu0
        %v760 = vadd.f32 %v675, %v759
        %v761 = vpop.f32.mrb[0].mxu0
        %762 = vdwg.mxu0
        %v763 = vstv %s666
        %v764 = vmul.f32 %v763, %v755
        %v765 = vmul.f32 %v763, %v760
        %v766 = vld [vmem:[%s3] sm:$0xff]
        %v767 = vld [vmem:[%s3 + $0x8] sm:$0xff]
        %v768 = vadd.f32 %v764, %v766
        %v769 = vadd.f32 %v765, %v767
        %v770 = vld [vmem:[%s16] sm:$0x1]
        %v771 = vld [vmem:[%s17] sm:$0x1]
        %v772 = vld [vmem:[%s18] sm:$0x1]
        %s773 = sld [smem:[#allocation3]]
        loop: start=0, step=1, limit=2
        $region105: #{tpu_custom_call.1} parent=103 // loop_pre_header
          _
        $region106: #{tpu_custom_call.1} parent=103 // loop_header
          %s775 = sphi 0, %s779
          %p776 = scmp.ge.s32.totalorder %s775, 2
          %v780 = vphi 0.0, %v2185
          %v781 = vphi 0.0, %v2186
        $region107: #{tpu_custom_call.1} parent=103 // loop_header_branch
          %778 = sbr.rel (%p776) target = $region111
        $region108: #{tpu_custom_call.1} parent=103 // loop_body
          %v782 = vadd.f32 %v780, %v768
          %v783 = vadd.f32 %v781, %v769
          loop: start=0, step=1, limit=2
          $region112: #{tpu_custom_call.1} parent=108 // loop_pre_header
            _
          $region113: #{tpu_custom_call.1} parent=108 // loop_header
            %s785 = sphi 0, %s789
            %p786 = scmp.ge.s32.totalorder %s785, 2
            %v790 = vphi %v782, %v2141
            %v791 = vphi %v783, %v2142
          $region114: #{tpu_custom_call.1} parent=108 // loop_header_branch
            %788 = sbr.rel (%p786) target = $region118
          $region115: #{tpu_custom_call.1} parent=108 // loop_body
            %s792 = scalar_lea.vmem %s4, %s785
            %v793 = vld [vmem:[%s792] sm:$0x1]
            %s794 = scalar_lea.vmem %s5, %s785
            %v795 = vld [vmem:[%s794] sm:$0x1]
            %vm796 = vcmask 261120
            %v797 = vsel %vm796, %v790, 0.0
            %798 = vadd.xlane.f32.xlu0 %v797
            %v799 = vpop.xlane.xlu0 %798
            %v800 = vsel %vm796, %v791, 0.0
            %801 = vadd.xlane.f32.xlu0 %v800
            %v802 = vpop.xlane.xlu0 %801
            %v803 = vrcp.pop 32.0
            %v804 = vmul.f32 %v799, %v803
            %v805 = vmul.f32 %v802, %v803
            %v806 = vsub.f32 %v790, %v804
            %v807 = vsub.f32 %v791, %v805
            %v808 = vmul.f32 %v806, %v806
            %v809 = vmul.f32 %v807, %v807
            %v810 = vsel %vm796, %v808, 0.0
            %811 = vadd.xlane.f32.xlu0 %v810
            %v812 = vpop.xlane.xlu0 %811
            %v813 = vsel %vm796, %v809, 0.0
            %814 = vadd.xlane.f32.xlu0 %v813
            %v815 = vpop.xlane.xlu0 %814
            %v816 = vmul.f32 %v812, %v803
            %v817 = vmul.f32 %v815, %v803
            %v818 = vadd.f32 %v816, 1e-05
            %v819 = vadd.f32 %v817, 1e-05
            %v820 = vrsqrt.pop %v818
            %v821 = vrsqrt.pop %v819
            %v822 = vmul.f32 %v806, %v820
            %v823 = vmul.f32 %v807, %v821
            %v825 = vlaneseq
            %v826 = vshrl.u32 %v825, 7
            %v827 = vsub.s32 0, %v826
            %v828 = vrot.slane %v793, %v827
            %v830 = vmul.f32 %v822, %v828
            %v831 = vmul.f32 %v823, %v828
            %v833 = vlaneseq
            %v834 = vshrl.u32 %v833, 7
            %v835 = vsub.s32 0, %v834
            %v836 = vrot.slane %v795, %v835
            %v838 = vadd.f32 %v830, %v836
            %v839 = vadd.f32 %v831, %v836
            %s840 = smul.u32 %s785, 32
            %s841 = scalar_lea.vmem %s6, %s840
            %v842 = vld [vmem:[%s841] sm:$0xff]
            %v843 = vld [vmem:[%s841 + $0x8] sm:$0xff]
            %v844 = vld [vmem:[%s841 + $0x10] sm:$0xff]
            %v845 = vld [vmem:[%s841 + $0x18] sm:$0xff]
            %s846 = scalar_lea.vmem %s7, %s785
            %v847 = vld [vmem:[%s846] sm:$0x1]
            %v849 = vlaneseq
            %v850 = vshrl.u32 %v849, 7
            %v851 = vsub.s32 0, %v850
            %v852 = vrot.slane %v847, %v851
            %v855 = vsel %vm796, %v838, 0
            %v858 = vsel %vm796, %v839, 0
            %860 = vmatprep.subr.mxu0 0.0
            %861 = vmatpush1.msra.mxu0 %v842
            %862 = vmatprep.subr.mxu0 0.0
            %863 = vmatpush1.msra.mxu0 %v843
            %864 = vmatprep.subr.mxu0 0.0
            %865 = vmatpush1.msra.mxu0 %v844
            %866 = vmatprep.subr.mxu0 0.0
            %867 = vmatpush1.msra.mxu0 %v845
            %868 = vmatprep.subr.mxu0 0.0
            %869 = vmatpush1.msra.mxu0 0.0
            %870 = vmatprep.subr.mxu0 0.0
            %871 = vmatpush1.msra.mxu0 0.0
            %872 = vmatprep.subr.mxu0 0.0
            %873 = vmatpush1.msra.mxu0 0.0
            %874 = vmatprep.subr.mxu0 0.0
            %875 = vmatpush1.msra.mxu0 0.0
            %876 = vmatprep.subr.mxu0 0.0
            %877 = vmatpush1.msra.mxu0 0.0
            %878 = vmatprep.subr.mxu0 0.0
            %879 = vmatpush1.msra.mxu0 0.0
            %880 = vmatprep.subr.mxu0 0.0
            %881 = vmatpush1.msra.mxu0 0.0
            %882 = vmatprep.subr.mxu0 0.0
            %883 = vmatpush1.msra.mxu0 0.0
            %884 = vmatprep.subr.mxu0 0.0
            %885 = vmatpush1.msra.mxu0 0.0
            %886 = vmatprep.subr.mxu0 0.0
            %887 = vmatpush1.msra.mxu0 0.0
            %888 = vmatprep.subr.mxu0 0.0
            %889 = vmatpush1.msra.mxu0 0.0
            %890 = vmatprep.subr.mxu0 0.0
            %891 = vmatpush1.msra.mxu0 0.0
            %892 = vmatprep.subr.mxu0 0.0
            %893 = vmatpush1.msra.mxu0 0.0
            %894 = vmatprep.subr.mxu0 0.0
            %895 = vmatpush1.msra.mxu0 0.0
            %896 = vmatprep.subr.mxu0 0.0
            %897 = vmatpush1.msra.mxu0 0.0
            %898 = vmatprep.subr.mxu0 0.0
            %899 = vmatpush1.msra.mxu0 0.0
            %900 = vmatprep.subr.mxu0 0.0
            %901 = vmatpush1.msra.mxu0 0.0
            %902 = vmatprep.subr.mxu0 0.0
            %903 = vmatpush1.msra.mxu0 0.0
            %904 = vmatprep.subr.mxu0 0.0
            %905 = vmatpush1.msra.mxu0 0.0
            %906 = vmatprep.subr.mxu0 0.0
            %907 = vmatpush1.msra.mxu0 0.0
            %908 = vmatprep.subr.mxu0 0.0
            %909 = vmatpush1.msra.mxu0 0.0
            %910 = vmatprep.subr.mxu0 0.0
            %911 = vmatpush1.msra.mxu0 0.0
            %912 = vmatprep.subr.mxu0 0.0
            %913 = vmatpush1.msra.mxu0 0.0
            %914 = vmatprep.subr.mxu0 0.0
            %915 = vmatpush1.msra.mxu0 0.0
            %916 = vmatprep.subr.mxu0 0.0
            %917 = vmatpush1.msra.mxu0 0.0
            %918 = vmatprep.subr.mxu0 0.0
            %919 = vmatpush1.msra.mxu0 0.0
            %920 = vmatprep.subr.mxu0 0.0
            %921 = vmatpush1.msra.mxu0 0.0
            %922 = vmatprep.subr.mxu0 0.0
            %923 = vmatpush1.msra.mxu0 0.0
            %924 = vmatprep.mubr.f32.mxu0 0.0
            %925 = vmatmul.mubr.f32.gmra.mrb[0].mxu0 %v855
            %v926 = vpop.f32.mrb[0].mxu0
            %v927 = vadd.f32 %v852, %v926
            %v928 = vpop.f32.mrb[0].mxu0
            %929 = vmatprep.mubr.f32.mxu0 0.0
            %930 = vmatmul.mubr.f32.gmra.mrb[0].mxu0 %v858
            %v931 = vpop.f32.mrb[0].mxu0
            %v932 = vadd.f32 %v852, %v931
            %v933 = vpop.f32.mrb[0].mxu0
            %934 = vdwg.mxu0
            %937 = vrot.lane.b32.xlu0 %v927, 120
            %v938 = vpop.permute.xlu0 %937
            %939 = vrot.lane.b32.xlu0 %v932, 120
            %v940 = vpop.permute.xlu0 %939
            %941 = vrot.lane.b32.xlu0 %v927, 112
            %v942 = vpop.permute.xlu0 %941
            %943 = vrot.lane.b32.xlu0 %v932, 112
            %v944 = vpop.permute.xlu0 %943
            %945 = vrot.lane.b32.xlu0 %v927, 104
            %v946 = vpop.permute.xlu0 %945
            %947 = vrot.lane.b32.xlu0 %v932, 104
            %v948 = vpop.permute.xlu0 %947
            %949 = vrot.lane.b32.xlu0 %v927, 96
            %v950 = vpop.permute.xlu0 %949
            %951 = vrot.lane.b32.xlu0 %v932, 96
            %v952 = vpop.permute.xlu0 %951
            %vm953 = vcmask 64512
            %v954 = vsel %vm953, %v927, 0
            %v956 = vsel %vm953, %v932, 0
            %v958 = vsel %vm953, %v950, 0
            %v960 = vsel %vm953, %v952, 0
            %962 = vmatprep.subr.mxu0 0.0
            %963 = vmatpush1.xpose.msra.mxu0 %v958
            %964 = vmatprep.subr.mxu0 0.0
            %965 = vmatpush1.xpose.msra.mxu0 %v960
            %966 = vmatprep.subr.mxu0 0.0
            %967 = vmatpush1.xpose.msra.mxu0 0.0
            %968 = vmatprep.subr.mxu0 0.0
            %969 = vmatpush1.xpose.msra.mxu0 0.0
            %970 = vmatprep.subr.mxu0 0.0
            %971 = vmatpush1.xpose.msra.mxu0 0.0
            %972 = vmatprep.subr.mxu0 0.0
            %973 = vmatpush1.xpose.msra.mxu0 0.0
            %974 = vmatprep.subr.mxu0 0.0
            %975 = vmatpush1.xpose.msra.mxu0 0.0
            %976 = vmatprep.subr.mxu0 0.0
            %977 = vmatpush1.xpose.msra.mxu0 0.0
            %978 = vmatprep.subr.mxu0 0.0
            %979 = vmatpush1.xpose.msra.mxu0 0.0
            %980 = vmatprep.subr.mxu0 0.0
            %981 = vmatpush1.xpose.msra.mxu0 0.0
            %982 = vmatprep.subr.mxu0 0.0
            %983 = vmatpush1.xpose.msra.mxu0 0.0
            %984 = vmatprep.subr.mxu0 0.0
            %985 = vmatpush1.xpose.msra.mxu0 0.0
            %986 = vmatprep.subr.mxu0 0.0
            %987 = vmatpush1.xpose.msra.mxu0 0.0
            %988 = vmatprep.subr.mxu0 0.0
            %989 = vmatpush1.xpose.msra.mxu0 0.0
            %990 = vmatprep.subr.mxu0 0.0
            %991 = vmatpush1.xpose.msra.mxu0 0.0
            %992 = vmatprep.subr.mxu0 0.0
            %993 = vmatpush1.xpose.msra.mxu0 0.0
            %994 = vmatprep.subr.mxu0 0.0
            %995 = vmatpush1.xpose.msra.mxu0 0.0
            %996 = vmatprep.subr.mxu0 0.0
            %997 = vmatpush1.xpose.msra.mxu0 0.0
            %998 = vmatprep.subr.mxu0 0.0
            %999 = vmatpush1.xpose.msra.mxu0 0.0
            %1000 = vmatprep.subr.mxu0 0.0
            %1001 = vmatpush1.xpose.msra.mxu0 0.0
            %1002 = vmatprep.subr.mxu0 0.0
            %1003 = vmatpush1.xpose.msra.mxu0 0.0
            %1004 = vmatprep.subr.mxu0 0.0
            %1005 = vmatpush1.xpose.msra.mxu0 0.0
            %1006 = vmatprep.subr.mxu0 0.0
            %1007 = vmatpush1.xpose.msra.mxu0 0.0
            %1008 = vmatprep.subr.mxu0 0.0
            %1009 = vmatpush1.xpose.msra.mxu0 0.0
            %1010 = vmatprep.subr.mxu0 0.0
            %1011 = vmatpush1.xpose.msra.mxu0 0.0
            %1012 = vmatprep.subr.mxu0 0.0
            %1013 = vmatpush1.xpose.msra.mxu0 0.0
            %1014 = vmatprep.subr.mxu0 0.0
            %1015 = vmatpush1.xpose.msra.mxu0 0.0
            %1016 = vmatprep.subr.mxu0 0.0
            %1017 = vmatpush1.xpose.msra.mxu0 0.0
            %1018 = vmatprep.subr.mxu0 0.0
            %1019 = vmatpush1.xpose.msra.mxu0 0.0
            %1020 = vmatprep.subr.mxu0 0.0
            %1021 = vmatpush1.xpose.msra.mxu0 0.0
            %1022 = vmatprep.subr.mxu0 0.0
            %1023 = vmatpush1.xpose.msra.mxu0 0.0
            %1024 = vmatprep.subr.mxu0 0.0
            %1025 = vmatpush1.xpose.msra.mxu0 0.0
            %1026 = vmatprep.mubr.f32.mxu0 0.0
            %1027 = vmatmul.mubr.f32.gmra.mrb[0].mxu0 %v954
            %v1028 = vpop.f32.mrb[0].mxu0
            %v1029 = vadd.f32 0.0, %v1028
            %v1030 = vpop.f32.mrb[0].mxu0
            %1031 = vmatprep.mubr.f32.mxu0 0.0
            %1032 = vmatmul.mubr.f32.gmra.mrb[0].mxu0 %v956
            %v1033 = vpop.f32.mrb[0].mxu0
            %v1034 = vadd.f32 0.0, %v1033
            %v1035 = vpop.f32.mrb[0].mxu0
            %1036 = vdwg.mxu0
            %1037 = vrot.lane.b32.xlu0 %v938, 96
            %v1038 = vpop.permute.xlu0 %1037
            %1039 = vrot.lane.b32.xlu0 %v940, 96
            %v1040 = vpop.permute.xlu0 %1039
            %v1041 = vsel %vm953, %v938, 0
            %v1043 = vsel %vm953, %v940, 0
            %v1045 = vsel %vm953, %v1038, 0
            %v1047 = vsel %vm953, %v1040, 0
            %1049 = vmatprep.subr.mxu0 0.0
            %1050 = vmatpush1.xpose.msra.mxu0 %v1045
            %1051 = vmatprep.subr.mxu0 0.0
            %1052 = vmatpush1.xpose.msra.mxu0 %v1047
            %1053 = vmatprep.subr.mxu0 0.0
            %1054 = vmatpush1.xpose.msra.mxu0 0.0
            %1055 = vmatprep.subr.mxu0 0.0
            %1056 = vmatpush1.xpose.msra.mxu0 0.0
            %1057 = vmatprep.subr.mxu0 0.0
            %1058 = vmatpush1.xpose.msra.mxu0 0.0
            %1059 = vmatprep.subr.mxu0 0.0
            %1060 = vmatpush1.xpose.msra.mxu0 0.0
            %1061 = vmatprep.subr.mxu0 0.0
            %1062 = vmatpush1.xpose.msra.mxu0 0.0
            %1063 = vmatprep.subr.mxu0 0.0
            %1064 = vmatpush1.xpose.msra.mxu0 0.0
            %1065 = vmatprep.subr.mxu0 0.0
            %1066 = vmatpush1.xpose.msra.mxu0 0.0
            %1067 = vmatprep.subr.mxu0 0.0
            %1068 = vmatpush1.xpose.msra.mxu0 0.0
            %1069 = vmatprep.subr.mxu0 0.0
            %1070 = vmatpush1.xpose.msra.mxu0 0.0
            %1071 = vmatprep.subr.mxu0 0.0
            %1072 = vmatpush1.xpose.msra.mxu0 0.0
            %1073 = vmatprep.subr.mxu0 0.0
            %1074 = vmatpush1.xpose.msra.mxu0 0.0
            %1075 = vmatprep.subr.mxu0 0.0
            %1076 = vmatpush1.xpose.msra.mxu0 0.0
            %1077 = vmatprep.subr.mxu0 0.0
            %1078 = vmatpush1.xpose.msra.mxu0 0.0
            %1079 = vmatprep.subr.mxu0 0.0
            %1080 = vmatpush1.xpose.msra.mxu0 0.0
            %1081 = vmatprep.subr.mxu0 0.0
            %1082 = vmatpush1.xpose.msra.mxu0 0.0
            %1083 = vmatprep.subr.mxu0 0.0
            %1084 = vmatpush1.xpose.msra.mxu0 0.0
            %1085 = vmatprep.subr.mxu0 0.0
            %1086 = vmatpush1.xpose.msra.mxu0 0.0
            %1087 = vmatprep.subr.mxu0 0.0
            %1088 = vmatpush1.xpose.msra.mxu0 0.0
            %1089 = vmatprep.subr.mxu0 0.0
            %1090 = vmatpush1.xpose.msra.mxu0 0.0
            %1091 = vmatprep.subr.mxu0 0.0
            %1092 = vmatpush1.xpose.msra.mxu0 0.0
            %1093 = vmatprep.subr.mxu0 0.0
            %1094 = vmatpush1.xpose.msra.mxu0 0.0
            %1095 = vmatprep.subr.mxu0 0.0
            %1096 = vmatpush1.xpose.msra.mxu0 0.0
            %1097 = vmatprep.subr.mxu0 0.0
            %1098 = vmatpush1.xpose.msra.mxu0 0.0
            %1099 = vmatprep.subr.mxu0 0.0
            %1100 = vmatpush1.xpose.msra.mxu0 0.0
            %1101 = vmatprep.subr.mxu0 0.0
            %1102 = vmatpush1.xpose.msra.mxu0 0.0
            %1103 = vmatprep.subr.mxu0 0.0
            %1104 = vmatpush1.xpose.msra.mxu0 0.0
            %1105 = vmatprep.subr.mxu0 0.0
            %1106 = vmatpush1.xpose.msra.mxu0 0.0
            %1107 = vmatprep.subr.mxu0 0.0
            %1108 = vmatpush1.xpose.msra.mxu0 0.0
            %1109 = vmatprep.subr.mxu0 0.0
            %1110 = vmatpush1.xpose.msra.mxu0 0.0
            %1111 = vmatprep.subr.mxu0 0.0
            %1112 = vmatpush1.xpose.msra.mxu0 0.0
            %1113 = vmatprep.mubr.f32.mxu0 0.0
            %1114 = vmatmul.mubr.f32.gmra.mrb[0].mxu0 %v1041
            %v1115 = vpop.f32.mrb[0].mxu0
            %v1116 = vadd.f32 0.0, %v1115
            %v1117 = vpop.f32.mrb[0].mxu0
            %1118 = vmatprep.mubr.f32.mxu0 0.0
            %1119 = vmatmul.mubr.f32.gmra.mrb[0].mxu0 %v1043
            %v1120 = vpop.f32.mrb[0].mxu0
            %v1121 = vadd.f32 0.0, %v1120
            %v1122 = vpop.f32.mrb[0].mxu0
            %1123 = vdwg.mxu0
            %1124 = vrot.lane.b32.xlu0 %v942, 96
            %v1125 = vpop.permute.xlu0 %1124
            %1126 = vrot.lane.b32.xlu0 %v944, 96
            %v1127 = vpop.permute.xlu0 %1126
            %v1128 = vsel %vm953, %v942, 0
            %v1130 = vsel %vm953, %v944, 0
            %v1132 = vsel %vm953, %v1125, 0
            %v1134 = vsel %vm953, %v1127, 0
            %1136 = vmatprep.subr.mxu0 0.0
            %1137 = vmatpush1.xpose.msra.mxu0 %v1132
            %1138 = vmatprep.subr.mxu0 0.0
            %1139 = vmatpush1.xpose.msra.mxu0 %v1134
            %1140 = vmatprep.subr.mxu0 0.0
            %1141 = vmatpush1.xpose.msra.mxu0 0.0
            %1142 = vmatprep.subr.mxu0 0.0
            %1143 = vmatpush1.xpose.msra.mxu0 0.0
            %1144 = vmatprep.subr.mxu0 0.0
            %1145 = vmatpush1.xpose.msra.mxu0 0.0
            %1146 = vmatprep.subr.mxu0 0.0
            %1147 = vmatpush1.xpose.msra.mxu0 0.0
            %1148 = vmatprep.subr.mxu0 0.0
            %1149 = vmatpush1.xpose.msra.mxu0 0.0
            %1150 = vmatprep.subr.mxu0 0.0
            %1151 = vmatpush1.xpose.msra.mxu0 0.0
            %1152 = vmatprep.subr.mxu0 0.0
            %1153 = vmatpush1.xpose.msra.mxu0 0.0
            %1154 = vmatprep.subr.mxu0 0.0
            %1155 = vmatpush1.xpose.msra.mxu0 0.0
            %1156 = vmatprep.subr.mxu0 0.0
            %1157 = vmatpush1.xpose.msra.mxu0 0.0
            %1158 = vmatprep.subr.mxu0 0.0
            %1159 = vmatpush1.xpose.msra.mxu0 0.0
            %1160 = vmatprep.subr.mxu0 0.0
            %1161 = vmatpush1.xpose.msra.mxu0 0.0
            %1162 = vmatprep.subr.mxu0 0.0
            %1163 = vmatpush1.xpose.msra.mxu0 0.0
            %1164 = vmatprep.subr.mxu0 0.0
            %1165 = vmatpush1.xpose.msra.mxu0 0.0
            %1166 = vmatprep.subr.mxu0 0.0
            %1167 = vmatpush1.xpose.msra.mxu0 0.0
            %1168 = vmatprep.subr.mxu0 0.0
            %1169 = vmatpush1.xpose.msra.mxu0 0.0
            %1170 = vmatprep.subr.mxu0 0.0
            %1171 = vmatpush1.xpose.msra.mxu0 0.0
            %1172 = vmatprep.subr.mxu0 0.0
            %1173 = vmatpush1.xpose.msra.mxu0 0.0
            %1174 = vmatprep.subr.mxu0 0.0
            %1175 = vmatpush1.xpose.msra.mxu0 0.0
            %1176 = vmatprep.subr.mxu0 0.0
            %1177 = vmatpush1.xpose.msra.mxu0 0.0
            %1178 = vmatprep.subr.mxu0 0.0
            %1179 = vmatpush1.xpose.msra.mxu0 0.0
            %1180 = vmatprep.subr.mxu0 0.0
            %1181 = vmatpush1.xpose.msra.mxu0 0.0
            %1182 = vmatprep.subr.mxu0 0.0
            %1183 = vmatpush1.xpose.msra.mxu0 0.0
            %1184 = vmatprep.subr.mxu0 0.0
            %1185 = vmatpush1.xpose.msra.mxu0 0.0
            %1186 = vmatprep.subr.mxu0 0.0
            %1187 = vmatpush1.xpose.msra.mxu0 0.0
            %1188 = vmatprep.subr.mxu0 0.0
            %1189 = vmatpush1.xpose.msra.mxu0 0.0
            %1190 = vmatprep.subr.mxu0 0.0
            %1191 = vmatpush1.xpose.msra.mxu0 0.0
            %1192 = vmatprep.subr.mxu0 0.0
            %1193 = vmatpush1.xpose.msra.mxu0 0.0
            %1194 = vmatprep.subr.mxu0 0.0
            %1195 = vmatpush1.xpose.msra.mxu0 0.0
            %1196 = vmatprep.subr.mxu0 0.0
            %1197 = vmatpush1.xpose.msra.mxu0 0.0
            %1198 = vmatprep.subr.mxu0 0.0
            %1199 = vmatpush1.xpose.msra.mxu0 0.0
            %1200 = vmatprep.mubr.f32.mxu0 0.0
            %1201 = vmatmul.mubr.f32.gmra.mrb[0].mxu0 %v1128
            %v1202 = vpop.f32.mrb[0].mxu0
            %v1203 = vadd.f32 0.0, %v1202
            %v1204 = vpop.f32.mrb[0].mxu0
            %1205 = vmatprep.mubr.f32.mxu0 0.0
            %1206 = vmatmul.mubr.f32.gmra.mrb[0].mxu0 %v1130
            %v1207 = vpop.f32.mrb[0].mxu0
            %v1208 = vadd.f32 0.0, %v1207
            %v1209 = vpop.f32.mrb[0].mxu0
            %1210 = vdwg.mxu0
            %1211 = vrot.lane.b32.xlu0 %v946, 96
            %v1212 = vpop.permute.xlu0 %1211
            %1213 = vrot.lane.b32.xlu0 %v948, 96
            %v1214 = vpop.permute.xlu0 %1213
            %v1215 = vsel %vm953, %v946, 0
            %v1217 = vsel %vm953, %v948, 0
            %v1219 = vsel %vm953, %v1212, 0
            %v1221 = vsel %vm953, %v1214, 0
            %1223 = vmatprep.subr.mxu0 0.0
            %1224 = vmatpush1.xpose.msra.mxu0 %v1219
            %1225 = vmatprep.subr.mxu0 0.0
            %1226 = vmatpush1.xpose.msra.mxu0 %v1221
            %1227 = vmatprep.subr.mxu0 0.0
            %1228 = vmatpush1.xpose.msra.mxu0 0.0
            %1229 = vmatprep.subr.mxu0 0.0
            %1230 = vmatpush1.xpose.msra.mxu0 0.0
            %1231 = vmatprep.subr.mxu0 0.0
            %1232 = vmatpush1.xpose.msra.mxu0 0.0
            %1233 = vmatprep.subr.mxu0 0.0
            %1234 = vmatpush1.xpose.msra.mxu0 0.0
            %1235 = vmatprep.subr.mxu0 0.0
            %1236 = vmatpush1.xpose.msra.mxu0 0.0
            %1237 = vmatprep.subr.mxu0 0.0
            %1238 = vmatpush1.xpose.msra.mxu0 0.0
            %1239 = vmatprep.subr.mxu0 0.0
            %1240 = vmatpush1.xpose.msra.mxu0 0.0
            %1241 = vmatprep.subr.mxu0 0.0
            %1242 = vmatpush1.xpose.msra.mxu0 0.0
            %1243 = vmatprep.subr.mxu0 0.0
            %1244 = vmatpush1.xpose.msra.mxu0 0.0
            %1245 = vmatprep.subr.mxu0 0.0
            %1246 = vmatpush1.xpose.msra.mxu0 0.0
            %1247 = vmatprep.subr.mxu0 0.0
            %1248 = vmatpush1.xpose.msra.mxu0 0.0
            %1249 = vmatprep.subr.mxu0 0.0
            %1250 = vmatpush1.xpose.msra.mxu0 0.0
            %1251 = vmatprep.subr.mxu0 0.0
            %1252 = vmatpush1.xpose.msra.mxu0 0.0
            %1253 = vmatprep.subr.mxu0 0.0
            %1254 = vmatpush1.xpose.msra.mxu0 0.0
            %1255 = vmatprep.subr.mxu0 0.0
            %1256 = vmatpush1.xpose.msra.mxu0 0.0
            %1257 = vmatprep.subr.mxu0 0.0
            %1258 = vmatpush1.xpose.msra.mxu0 0.0
            %1259 = vmatprep.subr.mxu0 0.0
            %1260 = vmatpush1.xpose.msra.mxu0 0.0
            %1261 = vmatprep.subr.mxu0 0.0
            %1262 = vmatpush1.xpose.msra.mxu0 0.0
            %1263 = vmatprep.subr.mxu0 0.0
            %1264 = vmatpush1.xpose.msra.mxu0 0.0
            %1265 = vmatprep.subr.mxu0 0.0
            %1266 = vmatpush1.xpose.msra.mxu0 0.0
            %1267 = vmatprep.subr.mxu0 0.0
            %1268 = vmatpush1.xpose.msra.mxu0 0.0
            %1269 = vmatprep.subr.mxu0 0.0
            %1270 = vmatpush1.xpose.msra.mxu0 0.0
            %1271 = vmatprep.subr.mxu0 0.0
            %1272 = vmatpush1.xpose.msra.mxu0 0.0
            %1273 = vmatprep.subr.mxu0 0.0
            %1274 = vmatpush1.xpose.msra.mxu0 0.0
            %1275 = vmatprep.subr.mxu0 0.0
            %1276 = vmatpush1.xpose.msra.mxu0 0.0
            %1277 = vmatprep.subr.mxu0 0.0
            %1278 = vmatpush1.xpose.msra.mxu0 0.0
            %1279 = vmatprep.subr.mxu0 0.0
            %1280 = vmatpush1.xpose.msra.mxu0 0.0
            %1281 = vmatprep.subr.mxu0 0.0
            %1282 = vmatpush1.xpose.msra.mxu0 0.0
            %1283 = vmatprep.subr.mxu0 0.0
            %1284 = vmatpush1.xpose.msra.mxu0 0.0
            %1285 = vmatprep.subr.mxu0 0.0
            %1286 = vmatpush1.xpose.msra.mxu0 0.0
            %1287 = vmatprep.mubr.f32.mxu0 0.0
            %1288 = vmatmul.mubr.f32.gmra.mrb[0].mxu0 %v1215
            %v1289 = vpop.f32.mrb[0].mxu0
            %v1290 = vadd.f32 0.0, %v1289
            %v1291 = vpop.f32.mrb[0].mxu0
            %1292 = vmatprep.mubr.f32.mxu0 0.0
            %1293 = vmatmul.mubr.f32.gmra.mrb[0].mxu0 %v1217
            %v1294 = vpop.f32.mrb[0].mxu0
            %v1295 = vadd.f32 0.0, %v1294
            %v1296 = vpop.f32.mrb[0].mxu0
            %1297 = vdwg.mxu0
            %v1298 = vmul.f32 %v1029, 0.35355338
            %v1299 = vmul.f32 %v1034, 0.35355338
            %v1300 = vmul.f32 %v1116, 0.35355338
            %v1301 = vmul.f32 %v1121, 0.35355338
            %v1302 = vmul.f32 %v1203, 0.35355338
            %v1303 = vmul.f32 %v1208, 0.35355338
            %v1304 = vmul.f32 %v1290, 0.35355338
            %v1305 = vmul.f32 %v1295, 0.35355338
            %v1306 = vadd.f32 %v1298, %v664
            %v1307 = vadd.f32 %v1299, %v665
            %v1308 = vadd.f32 %v1300, %v664
            %v1309 = vadd.f32 %v1301, %v665
            %v1310 = vadd.f32 %v1302, %v664
            %v1311 = vadd.f32 %v1303, %v665
            %v1312 = vadd.f32 %v1304, %v664
            %v1313 = vadd.f32 %v1305, %v665
            %vm1314 = vcmask 130048
            %v1315 = vsel %vm1314, %v1306, -inf
            %1316 = vmax.xlane.f32.xlu0 %v1315
            %v1317 = vpop.xlane.xlu0 %1316
            %v1318 = vsel %vm1314, %v1307, -inf
            %1319 = vmax.xlane.f32.xlu0 %v1318
            %v1320 = vpop.xlane.xlu0 %1319
            %v1321 = vsel %vm1314, %v1308, -inf
            %1322 = vmax.xlane.f32.xlu0 %v1321
            %v1323 = vpop.xlane.xlu0 %1322
            %v1324 = vsel %vm1314, %v1309, -inf
            %1325 = vmax.xlane.f32.xlu0 %v1324
            %v1326 = vpop.xlane.xlu0 %1325
            %v1327 = vsel %vm1314, %v1310, -inf
            %1328 = vmax.xlane.f32.xlu0 %v1327
            %v1329 = vpop.xlane.xlu0 %1328
            %v1330 = vsel %vm1314, %v1311, -inf
            %1331 = vmax.xlane.f32.xlu0 %v1330
            %v1332 = vpop.xlane.xlu0 %1331
            %v1333 = vsel %vm1314, %v1312, -inf
            %1334 = vmax.xlane.f32.xlu0 %v1333
            %v1335 = vpop.xlane.xlu0 %1334
            %v1336 = vsel %vm1314, %v1313, -inf
            %1337 = vmax.xlane.f32.xlu0 %v1336
            %v1338 = vpop.xlane.xlu0 %1337
            %v1339 = vsub.f32 %v1306, %v1317
            %v1340 = vsub.f32 %v1307, %v1320
            %v1341 = vsub.f32 %v1308, %v1323
            %v1342 = vsub.f32 %v1309, %v1326
            %v1343 = vsub.f32 %v1310, %v1329
            %v1344 = vsub.f32 %v1311, %v1332
            %v1345 = vsub.f32 %v1312, %v1335
            %v1346 = vsub.f32 %v1313, %v1338
            %v1347 = vmul.f32 %v1339, 1.442695
            %v1348 = vpow.pop %v1347
            %v1349 = vmul.f32 %v1340, 1.442695
            %v1350 = vpow.pop %v1349
            %v1351 = vmul.f32 %v1341, 1.442695
            %v1352 = vpow.pop %v1351
            %v1353 = vmul.f32 %v1342, 1.442695
            %v1354 = vpow.pop %v1353
            %v1355 = vmul.f32 %v1343, 1.442695
            %v1356 = vpow.pop %v1355
            %v1357 = vmul.f32 %v1344, 1.442695
            %v1358 = vpow.pop %v1357
            %v1359 = vmul.f32 %v1345, 1.442695
            %v1360 = vpow.pop %v1359
            %v1361 = vmul.f32 %v1346, 1.442695
            %v1362 = vpow.pop %v1361
            %v1363 = vsel %vm1314, %v1348, 0.0
            %1364 = vadd.xlane.f32.xlu0 %v1363
            %v1365 = vpop.xlane.xlu0 %1364
            %v1366 = vsel %vm1314, %v1350, 0.0
            %1367 = vadd.xlane.f32.xlu0 %v1366
            %v1368 = vpop.xlane.xlu0 %1367
            %v1369 = vsel %vm1314, %v1352, 0.0
            %1370 = vadd.xlane.f32.xlu0 %v1369
            %v1371 = vpop.xlane.xlu0 %1370
            %v1372 = vsel %vm1314, %v1354, 0.0
            %1373 = vadd.xlane.f32.xlu0 %v1372
            %v1374 = vpop.xlane.xlu0 %1373
            %v1375 = vsel %vm1314, %v1356, 0.0
            %1376 = vadd.xlane.f32.xlu0 %v1375
            %v1377 = vpop.xlane.xlu0 %1376
            %v1378 = vsel %vm1314, %v1358, 0.0
            %1379 = vadd.xlane.f32.xlu0 %v1378
            %v1380 = vpop.xlane.xlu0 %1379
            %v1381 = vsel %vm1314, %v1360, 0.0
            %1382 = vadd.xlane.f32.xlu0 %v1381
            %v1383 = vpop.xlane.xlu0 %1382
            %v1384 = vsel %vm1314, %v1362, 0.0
            %1385 = vadd.xlane.f32.xlu0 %v1384
            %v1386 = vpop.xlane.xlu0 %1385
            %v1387 = vrcp.pop %v1365
            %v1388 = vmul.f32 %v1348, %v1387
            %v1389 = vrcp.pop %v1368
            %v1390 = vmul.f32 %v1350, %v1389
            %v1391 = vrcp.pop %v1371
            %v1392 = vmul.f32 %v1352, %v1391
            %v1393 = vrcp.pop %v1374
            %v1394 = vmul.f32 %v1354, %v1393
            %v1395 = vrcp.pop %v1377
            %v1396 = vmul.f32 %v1356, %v1395
            %v1397 = vrcp.pop %v1380
            %v1398 = vmul.f32 %v1358, %v1397
            %v1399 = vrcp.pop %v1383
            %v1400 = vmul.f32 %v1360, %v1399
            %v1401 = vrcp.pop %v1386
            %v1402 = vmul.f32 %v1362, %v1401
            %1403 = vrot.lane.b32.xlu0 %v927, 64
            %v1404 = vpop.permute.xlu0 %1403
            %1405 = vrot.lane.b32.xlu0 %v932, 64
            %v1406 = vpop.permute.xlu0 %1405
            %v1410 = vsel %vm1314, %v1388, 0
            %v1413 = vsel %vm1314, %v1390, 0
            %1415 = vmatprep.subr.mxu0 0.0
            %1416 = vmatpush1.msra.mxu0 %v1404
            %1417 = vmatprep.subr.mxu0 0.0
            %1418 = vmatpush1.msra.mxu0 %v1406
            %1419 = vmatprep.subr.mxu0 0.0
            %1420 = vmatpush1.msra.mxu0 0.0
            %1421 = vmatprep.subr.mxu0 0.0
            %1422 = vmatpush1.msra.mxu0 0.0
            %1423 = vmatprep.subr.mxu0 0.0
            %1424 = vmatpush1.msra.mxu0 0.0
            %1425 = vmatprep.subr.mxu0 0.0
            %1426 = vmatpush1.msra.mxu0 0.0
            %1427 = vmatprep.subr.mxu0 0.0
            %1428 = vmatpush1.msra.mxu0 0.0
            %1429 = vmatprep.subr.mxu0 0.0
            %1430 = vmatpush1.msra.mxu0 0.0
            %1431 = vmatprep.subr.mxu0 0.0
            %1432 = vmatpush1.msra.mxu0 0.0
            %1433 = vmatprep.subr.mxu0 0.0
            %1434 = vmatpush1.msra.mxu0 0.0
            %1435 = vmatprep.subr.mxu0 0.0
            %1436 = vmatpush1.msra.mxu0 0.0
            %1437 = vmatprep.subr.mxu0 0.0
            %1438 = vmatpush1.msra.mxu0 0.0
            %1439 = vmatprep.subr.mxu0 0.0
            %1440 = vmatpush1.msra.mxu0 0.0
            %1441 = vmatprep.subr.mxu0 0.0
            %1442 = vmatpush1.msra.mxu0 0.0
            %1443 = vmatprep.subr.mxu0 0.0
            %1444 = vmatpush1.msra.mxu0 0.0
            %1445 = vmatprep.subr.mxu0 0.0
            %1446 = vmatpush1.msra.mxu0 0.0
            %1447 = vmatprep.subr.mxu0 0.0
            %1448 = vmatpush1.msra.mxu0 0.0
            %1449 = vmatprep.subr.mxu0 0.0
            %1450 = vmatpush1.msra.mxu0 0.0
            %1451 = vmatprep.subr.mxu0 0.0
            %1452 = vmatpush1.msra.mxu0 0.0
            %1453 = vmatprep.subr.mxu0 0.0
            %1454 = vmatpush1.msra.mxu0 0.0
            %1455 = vmatprep.subr.mxu0 0.0
            %1456 = vmatpush1.msra.mxu0 0.0
            %1457 = vmatprep.subr.mxu0 0.0
            %1458 = vmatpush1.msra.mxu0 0.0
            %1459 = vmatprep.subr.mxu0 0.0
            %1460 = vmatpush1.msra.mxu0 0.0
            %1461 = vmatprep.subr.mxu0 0.0
            %1462 = vmatpush1.msra.mxu0 0.0
            %1463 = vmatprep.subr.mxu0 0.0
            %1464 = vmatpush1.msra.mxu0 0.0
            %1465 = vmatprep.subr.mxu0 0.0
            %1466 = vmatpush1.msra.mxu0 0.0
            %1467 = vmatprep.subr.mxu0 0.0
            %1468 = vmatpush1.msra.mxu0 0.0
            %1469 = vmatprep.subr.mxu0 0.0
            %1470 = vmatpush1.msra.mxu0 0.0
            %1471 = vmatprep.subr.mxu0 0.0
            %1472 = vmatpush1.msra.mxu0 0.0
            %1473 = vmatprep.subr.mxu0 0.0
            %1474 = vmatpush1.msra.mxu0 0.0
            %1475 = vmatprep.subr.mxu0 0.0
            %1476 = vmatpush1.msra.mxu0 0.0
            %1477 = vmatprep.subr.mxu0 0.0
            %1478 = vmatpush1.msra.mxu0 0.0
            %1479 = vmatprep.mubr.f32.mxu0 0.0
            %1480 = vmatmul.mubr.f32.gmra.mrb[0].mxu0 %v1410
            %v1481 = vpop.f32.mrb[0].mxu0
            %v1482 = vadd.f32 0.0, %v1481
            %v1483 = vpop.f32.mrb[0].mxu0
            %1484 = vmatprep.mubr.f32.mxu0 0.0
            %1485 = vmatmul.mubr.f32.gmra.mrb[0].mxu0 %v1413
            %v1486 = vpop.f32.mrb[0].mxu0
            %v1487 = vadd.f32 0.0, %v1486
            %v1488 = vpop.f32.mrb[0].mxu0
            %1489 = vdwg.mxu0
            %1490 = vrot.lane.b32.xlu0 %v938, 64
            %v1491 = vpop.permute.xlu0 %1490
            %1492 = vrot.lane.b32.xlu0 %v940, 64
            %v1493 = vpop.permute.xlu0 %1492
            %v1497 = vsel %vm1314, %v1392, 0
            %v1500 = vsel %vm1314, %v1394, 0
            %1502 = vmatprep.subr.mxu0 0.0
            %1503 = vmatpush1.msra.mxu0 %v1491
            %1504 = vmatprep.subr.mxu0 0.0
            %1505 = vmatpush1.msra.mxu0 %v1493
            %1506 = vmatprep.subr.mxu0 0.0
            %1507 = vmatpush1.msra.mxu0 0.0
            %1508 = vmatprep.subr.mxu0 0.0
            %1509 = vmatpush1.msra.mxu0 0.0
            %1510 = vmatprep.subr.mxu0 0.0
            %1511 = vmatpush1.msra.mxu0 0.0
            %1512 = vmatprep.subr.mxu0 0.0
            %1513 = vmatpush1.msra.mxu0 0.0
            %1514 = vmatprep.subr.mxu0 0.0
            %1515 = vmatpush1.msra.mxu0 0.0
            %1516 = vmatprep.subr.mxu0 0.0
            %1517 = vmatpush1.msra.mxu0 0.0
            %1518 = vmatprep.subr.mxu0 0.0
            %1519 = vmatpush1.msra.mxu0 0.0
            %1520 = vmatprep.subr.mxu0 0.0
            %1521 = vmatpush1.msra.mxu0 0.0
            %1522 = vmatprep.subr.mxu0 0.0
            %1523 = vmatpush1.msra.mxu0 0.0
            %1524 = vmatprep.subr.mxu0 0.0
            %1525 = vmatpush1.msra.mxu0 0.0
            %1526 = vmatprep.subr.mxu0 0.0
            %1527 = vmatpush1.msra.mxu0 0.0
            %1528 = vmatprep.subr.mxu0 0.0
            %1529 = vmatpush1.msra.mxu0 0.0
            %1530 = vmatprep.subr.mxu0 0.0
            %1531 = vmatpush1.msra.mxu0 0.0
            %1532 = vmatprep.subr.mxu0 0.0
            %1533 = vmatpush1.msra.mxu0 0.0
            %1534 = vmatprep.subr.mxu0 0.0
            %1535 = vmatpush1.msra.mxu0 0.0
            %1536 = vmatprep.subr.mxu0 0.0
            %1537 = vmatpush1.msra.mxu0 0.0
            %1538 = vmatprep.subr.mxu0 0.0
            %1539 = vmatpush1.msra.mxu0 0.0
            %1540 = vmatprep.subr.mxu0 0.0
            %1541 = vmatpush1.msra.mxu0 0.0
            %1542 = vmatprep.subr.mxu0 0.0
            %1543 = vmatpush1.msra.mxu0 0.0
            %1544 = vmatprep.subr.mxu0 0.0
            %1545 = vmatpush1.msra.mxu0 0.0
            %1546 = vmatprep.subr.mxu0 0.0
            %1547 = vmatpush1.msra.mxu0 0.0
            %1548 = vmatprep.subr.mxu0 0.0
            %1549 = vmatpush1.msra.mxu0 0.0
            %1550 = vmatprep.subr.mxu0 0.0
            %1551 = vmatpush1.msra.mxu0 0.0
            %1552 = vmatprep.subr.mxu0 0.0
            %1553 = vmatpush1.msra.mxu0 0.0
            %1554 = vmatprep.subr.mxu0 0.0
            %1555 = vmatpush1.msra.mxu0 0.0
            %1556 = vmatprep.subr.mxu0 0.0
            %1557 = vmatpush1.msra.mxu0 0.0
            %1558 = vmatprep.subr.mxu0 0.0
            %1559 = vmatpush1.msra.mxu0 0.0
            %1560 = vmatprep.subr.mxu0 0.0
            %1561 = vmatpush1.msra.mxu0 0.0
            %1562 = vmatprep.subr.mxu0 0.0
            %1563 = vmatpush1.msra.mxu0 0.0
            %1564 = vmatprep.subr.mxu0 0.0
            %1565 = vmatpush1.msra.mxu0 0.0
            %1566 = vmatprep.mubr.f32.mxu0 0.0
            %1567 = vmatmul.mubr.f32.gmra.mrb[0].mxu0 %v1497
            %v1568 = vpop.f32.mrb[0].mxu0
            %v1569 = vadd.f32 0.0, %v1568
            %v1570 = vpop.f32.mrb[0].mxu0
            %1571 = vmatprep.mubr.f32.mxu0 0.0
            %1572 = vmatmul.mubr.f32.gmra.mrb[0].mxu0 %v1500
            %v1573 = vpop.f32.mrb[0].mxu0
            %v1574 = vadd.f32 0.0, %v1573
            %v1575 = vpop.f32.mrb[0].mxu0
            %1576 = vdwg.mxu0
            %1577 = vrot.lane.b32.xlu0 %v942, 64
            %v1578 = vpop.permute.xlu0 %1577
            %1579 = vrot.lane.b32.xlu0 %v944, 64
            %v1580 = vpop.permute.xlu0 %1579
            %v1584 = vsel %vm1314, %v1396, 0
            %v1587 = vsel %vm1314, %v1398, 0
            %1589 = vmatprep.subr.mxu0 0.0
            %1590 = vmatpush1.msra.mxu0 %v1578
            %1591 = vmatprep.subr.mxu0 0.0
            %1592 = vmatpush1.msra.mxu0 %v1580
            %1593 = vmatprep.subr.mxu0 0.0
            %1594 = vmatpush1.msra.mxu0 0.0
            %1595 = vmatprep.subr.mxu0 0.0
            %1596 = vmatpush1.msra.mxu0 0.0
            %1597 = vmatprep.subr.mxu0 0.0
            %1598 = vmatpush1.msra.mxu0 0.0
            %1599 = vmatprep.subr.mxu0 0.0
            %1600 = vmatpush1.msra.mxu0 0.0
            %1601 = vmatprep.subr.mxu0 0.0
            %1602 = vmatpush1.msra.mxu0 0.0
            %1603 = vmatprep.subr.mxu0 0.0
            %1604 = vmatpush1.msra.mxu0 0.0
            %1605 = vmatprep.subr.mxu0 0.0
            %1606 = vmatpush1.msra.mxu0 0.0
            %1607 = vmatprep.subr.mxu0 0.0
            %1608 = vmatpush1.msra.mxu0 0.0
            %1609 = vmatprep.subr.mxu0 0.0
            %1610 = vmatpush1.msra.mxu0 0.0
            %1611 = vmatprep.subr.mxu0 0.0
            %1612 = vmatpush1.msra.mxu0 0.0
            %1613 = vmatprep.subr.mxu0 0.0
            %1614 = vmatpush1.msra.mxu0 0.0
            %1615 = vmatprep.subr.mxu0 0.0
            %1616 = vmatpush1.msra.mxu0 0.0
            %1617 = vmatprep.subr.mxu0 0.0
            %1618 = vmatpush1.msra.mxu0 0.0
            %1619 = vmatprep.subr.mxu0 0.0
            %1620 = vmatpush1.msra.mxu0 0.0
            %1621 = vmatprep.subr.mxu0 0.0
            %1622 = vmatpush1.msra.mxu0 0.0
            %1623 = vmatprep.subr.mxu0 0.0
            %1624 = vmatpush1.msra.mxu0 0.0
            %1625 = vmatprep.subr.mxu0 0.0
            %1626 = vmatpush1.msra.mxu0 0.0
            %1627 = vmatprep.subr.mxu0 0.0
            %1628 = vmatpush1.msra.mxu0 0.0
            %1629 = vmatprep.subr.mxu0 0.0
            %1630 = vmatpush1.msra.mxu0 0.0
            %1631 = vmatprep.subr.mxu0 0.0
            %1632 = vmatpush1.msra.mxu0 0.0
            %1633 = vmatprep.subr.mxu0 0.0
            %1634 = vmatpush1.msra.mxu0 0.0
            %1635 = vmatprep.subr.mxu0 0.0
            %1636 = vmatpush1.msra.mxu0 0.0
            %1637 = vmatprep.subr.mxu0 0.0
            %1638 = vmatpush1.msra.mxu0 0.0
            %1639 = vmatprep.subr.mxu0 0.0
            %1640 = vmatpush1.msra.mxu0 0.0
            %1641 = vmatprep.subr.mxu0 0.0
            %1642 = vmatpush1.msra.mxu0 0.0
            %1643 = vmatprep.subr.mxu0 0.0
            %1644 = vmatpush1.msra.mxu0 0.0
            %1645 = vmatprep.subr.mxu0 0.0
            %1646 = vmatpush1.msra.mxu0 0.0
            %1647 = vmatprep.subr.mxu0 0.0
            %1648 = vmatpush1.msra.mxu0 0.0
            %1649 = vmatprep.subr.mxu0 0.0
            %1650 = vmatpush1.msra.mxu0 0.0
            %1651 = vmatprep.subr.mxu0 0.0
            %1652 = vmatpush1.msra.mxu0 0.0
            %1653 = vmatprep.mubr.f32.mxu0 0.0
            %1654 = vmatmul.mubr.f32.gmra.mrb[0].mxu0 %v1584
            %v1655 = vpop.f32.mrb[0].mxu0
            %v1656 = vadd.f32 0.0, %v1655
            %v1657 = vpop.f32.mrb[0].mxu0
            %1658 = vmatprep.mubr.f32.mxu0 0.0
            %1659 = vmatmul.mubr.f32.gmra.mrb[0].mxu0 %v1587
            %v1660 = vpop.f32.mrb[0].mxu0
            %v1661 = vadd.f32 0.0, %v1660
            %v1662 = vpop.f32.mrb[0].mxu0
            %1663 = vdwg.mxu0
            %1664 = vrot.lane.b32.xlu0 %v946, 64
            %v1665 = vpop.permute.xlu0 %1664
            %1666 = vrot.lane.b32.xlu0 %v948, 64
            %v1667 = vpop.permute.xlu0 %1666
            %v1671 = vsel %vm1314, %v1400, 0
            %v1674 = vsel %vm1314, %v1402, 0
            %1676 = vmatprep.subr.mxu0 0.0
            %1677 = vmatpush1.msra.mxu0 %v1665
            %1678 = vmatprep.subr.mxu0 0.0
            %1679 = vmatpush1.msra.mxu0 %v1667
            %1680 = vmatprep.subr.mxu0 0.0
            %1681 = vmatpush1.msra.mxu0 0.0
            %1682 = vmatprep.subr.mxu0 0.0
            %1683 = vmatpush1.msra.mxu0 0.0
            %1684 = vmatprep.subr.mxu0 0.0
            %1685 = vmatpush1.msra.mxu0 0.0
            %1686 = vmatprep.subr.mxu0 0.0
            %1687 = vmatpush1.msra.mxu0 0.0
            %1688 = vmatprep.subr.mxu0 0.0
            %1689 = vmatpush1.msra.mxu0 0.0
            %1690 = vmatprep.subr.mxu0 0.0
            %1691 = vmatpush1.msra.mxu0 0.0
            %1692 = vmatprep.subr.mxu0 0.0
            %1693 = vmatpush1.msra.mxu0 0.0
            %1694 = vmatprep.subr.mxu0 0.0
            %1695 = vmatpush1.msra.mxu0 0.0
            %1696 = vmatprep.subr.mxu0 0.0
            %1697 = vmatpush1.msra.mxu0 0.0
            %1698 = vmatprep.subr.mxu0 0.0
            %1699 = vmatpush1.msra.mxu0 0.0
            %1700 = vmatprep.subr.mxu0 0.0
            %1701 = vmatpush1.msra.mxu0 0.0
            %1702 = vmatprep.subr.mxu0 0.0
            %1703 = vmatpush1.msra.mxu0 0.0
            %1704 = vmatprep.subr.mxu0 0.0
            %1705 = vmatpush1.msra.mxu0 0.0
            %1706 = vmatprep.subr.mxu0 0.0
            %1707 = vmatpush1.msra.mxu0 0.0
            %1708 = vmatprep.subr.mxu0 0.0
            %1709 = vmatpush1.msra.mxu0 0.0
            %1710 = vmatprep.subr.mxu0 0.0
            %1711 = vmatpush1.msra.mxu0 0.0
            %1712 = vmatprep.subr.mxu0 0.0
            %1713 = vmatpush1.msra.mxu0 0.0
            %1714 = vmatprep.subr.mxu0 0.0
            %1715 = vmatpush1.msra.mxu0 0.0
            %1716 = vmatprep.subr.mxu0 0.0
            %1717 = vmatpush1.msra.mxu0 0.0
            %1718 = vmatprep.subr.mxu0 0.0
            %1719 = vmatpush1.msra.mxu0 0.0
            %1720 = vmatprep.subr.mxu0 0.0
            %1721 = vmatpush1.msra.mxu0 0.0
            %1722 = vmatprep.subr.mxu0 0.0
            %1723 = vmatpush1.msra.mxu0 0.0
            %1724 = vmatprep.subr.mxu0 0.0
            %1725 = vmatpush1.msra.mxu0 0.0
            %1726 = vmatprep.subr.mxu0 0.0
            %1727 = vmatpush1.msra.mxu0 0.0
            %1728 = vmatprep.subr.mxu0 0.0
            %1729 = vmatpush1.msra.mxu0 0.0
            %1730 = vmatprep.subr.mxu0 0.0
            %1731 = vmatpush1.msra.mxu0 0.0
            %1732 = vmatprep.subr.mxu0 0.0
            %1733 = vmatpush1.msra.mxu0 0.0
            %1734 = vmatprep.subr.mxu0 0.0
            %1735 = vmatpush1.msra.mxu0 0.0
            %1736 = vmatprep.subr.mxu0 0.0
            %1737 = vmatpush1.msra.mxu0 0.0
            %1738 = vmatprep.subr.mxu0 0.0
            %1739 = vmatpush1.msra.mxu0 0.0
            %1740 = vmatprep.mubr.f32.mxu0 0.0
            %1741 = vmatmul.mubr.f32.gmra.mrb[0].mxu0 %v1671
            %v1742 = vpop.f32.mrb[0].mxu0
            %v1743 = vadd.f32 0.0, %v1742
            %v1744 = vpop.f32.mrb[0].mxu0
            %1745 = vmatprep.mubr.f32.mxu0 0.0
            %1746 = vmatmul.mubr.f32.gmra.mrb[0].mxu0 %v1674
            %v1747 = vpop.f32.mrb[0].mxu0
            %v1748 = vadd.f32 0.0, %v1747
            %v1749 = vpop.f32.mrb[0].mxu0
            %1750 = vdwg.mxu0
            %1753 = vrot.lane.b32.xlu0 %v1569, 8
            %v1754 = vpop.permute.xlu0 %1753
            %1755 = vrot.lane.b32.xlu0 %v1574, 8
            %v1756 = vpop.permute.xlu0 %1755
            %1761 = vrot.lane.b32.xlu0 %v1656, 16
            %v1762 = vpop.permute.xlu0 %1761
            %1763 = vrot.lane.b32.xlu0 %v1661, 16
            %v1764 = vpop.permute.xlu0 %1763
            %1769 = vrot.lane.b32.xlu0 %v1743, 24
            %v1770 = vpop.permute.xlu0 %1769
            %1771 = vrot.lane.b32.xlu0 %v1748, 24
            %v1772 = vpop.permute.xlu0 %1771
            %v1775 = vsel %vm953, %v1482, %v1754
            %v1776 = vsel %vm953, %v1487, %v1756
            %v1777 = vsel %vm1314, %v1775, %v1762
            %v1778 = vsel %vm1314, %v1776, %v1764
            %vm1779 = vcmask 195584
            %v1780 = vsel %vm1779, %v1777, %v1770
            %v1781 = vsel %vm1779, %v1778, %v1772
            %s1782 = scalar_lea.vmem %s8, %s840
            %v1783 = vld [vmem:[%s1782] sm:$0xff]
            %v1784 = vld [vmem:[%s1782 + $0x8] sm:$0xff]
            %v1785 = vld [vmem:[%s1782 + $0x10] sm:$0xff]
            %v1786 = vld [vmem:[%s1782 + $0x18] sm:$0xff]
            %v1788 = vsel %vm796, %v1780, 0
            %v1791 = vsel %vm796, %v1781, 0
            %1793 = vmatprep.subr.mxu0 0.0
            %1794 = vmatpush1.msra.mxu0 %v1783
            %1795 = vmatprep.subr.mxu0 0.0
            %1796 = vmatpush1.msra.mxu0 %v1784
            %1797 = vmatprep.subr.mxu0 0.0
            %1798 = vmatpush1.msra.mxu0 %v1785
            %1799 = vmatprep.subr.mxu0 0.0
            %1800 = vmatpush1.msra.mxu0 %v1786
            %1801 = vmatprep.subr.mxu0 0.0
            %1802 = vmatpush1.msra.mxu0 0.0
            %1803 = vmatprep.subr.mxu0 0.0
            %1804 = vmatpush1.msra.mxu0 0.0
            %1805 = vmatprep.subr.mxu0 0.0
            %1806 = vmatpush1.msra.mxu0 0.0
            %1807 = vmatprep.subr.mxu0 0.0
            %1808 = vmatpush1.msra.mxu0 0.0
            %1809 = vmatprep.subr.mxu0 0.0
            %1810 = vmatpush1.msra.mxu0 0.0
            %1811 = vmatprep.subr.mxu0 0.0
            %1812 = vmatpush1.msra.mxu0 0.0
            %1813 = vmatprep.subr.mxu0 0.0
            %1814 = vmatpush1.msra.mxu0 0.0
            %1815 = vmatprep.subr.mxu0 0.0
            %1816 = vmatpush1.msra.mxu0 0.0
            %1817 = vmatprep.subr.mxu0 0.0
            %1818 = vmatpush1.msra.mxu0 0.0
            %1819 = vmatprep.subr.mxu0 0.0
            %1820 = vmatpush1.msra.mxu0 0.0
            %1821 = vmatprep.subr.mxu0 0.0
            %1822 = vmatpush1.msra.mxu0 0.0
            %1823 = vmatprep.subr.mxu0 0.0
            %1824 = vmatpush1.msra.mxu0 0.0
            %1825 = vmatprep.subr.mxu0 0.0
            %1826 = vmatpush1.msra.mxu0 0.0
            %1827 = vmatprep.subr.mxu0 0.0
            %1828 = vmatpush1.msra.mxu0 0.0
            %1829 = vmatprep.subr.mxu0 0.0
            %1830 = vmatpush1.msra.mxu0 0.0
            %1831 = vmatprep.subr.mxu0 0.0
            %1832 = vmatpush1.msra.mxu0 0.0
            %1833 = vmatprep.subr.mxu0 0.0
            %1834 = vmatpush1.msra.mxu0 0.0
            %1835 = vmatprep.subr.mxu0 0.0
            %1836 = vmatpush1.msra.mxu0 0.0
            %1837 = vmatprep.subr.mxu0 0.0
            %1838 = vmatpush1.msra.mxu0 0.0
            %1839 = vmatprep.subr.mxu0 0.0
            %1840 = vmatpush1.msra.mxu0 0.0
            %1841 = vmatprep.subr.mxu0 0.0
            %1842 = vmatpush1.msra.mxu0 0.0
            %1843 = vmatprep.subr.mxu0 0.0
            %1844 = vmatpush1.msra.mxu0 0.0
            %1845 = vmatprep.subr.mxu0 0.0
            %1846 = vmatpush1.msra.mxu0 0.0
            %1847 = vmatprep.subr.mxu0 0.0
            %1848 = vmatpush1.msra.mxu0 0.0
            %1849 = vmatprep.subr.mxu0 0.0
            %1850 = vmatpush1.msra.mxu0 0.0
            %1851 = vmatprep.subr.mxu0 0.0
            %1852 = vmatpush1.msra.mxu0 0.0
            %1853 = vmatprep.subr.mxu0 0.0
            %1854 = vmatpush1.msra.mxu0 0.0
            %1855 = vmatprep.subr.mxu0 0.0
            %1856 = vmatpush1.msra.mxu0 0.0
            %1857 = vmatprep.mubr.f32.mxu0 0.0
            %1858 = vmatmul.mubr.f32.gmra.mrb[0].mxu0 %v1788
            %v1859 = vpop.f32.mrb[0].mxu0
            %v1860 = vadd.f32 0.0, %v1859
            %v1861 = vpop.f32.mrb[0].mxu0
            %1862 = vmatprep.mubr.f32.mxu0 0.0
            %1863 = vmatmul.mubr.f32.gmra.mrb[0].mxu0 %v1791
            %v1864 = vpop.f32.mrb[0].mxu0
            %v1865 = vadd.f32 0.0, %v1864
            %v1866 = vpop.f32.mrb[0].mxu0
            %1867 = vdwg.mxu0
            %v1868 = vadd.f32 %v790, %v1860
            %v1869 = vadd.f32 %v791, %v1865
            %s1870 = scalar_lea.vmem %s9, %s785
            %v1871 = vld [vmem:[%s1870] sm:$0x1]
            %v1873 = vlaneseq
            %v1874 = vshrl.u32 %v1873, 7
            %v1875 = vsub.s32 0, %v1874
            %v1876 = vrot.slane %v1871, %v1875
            %v1878 = vadd.f32 %v1868, %v1876
            %v1879 = vadd.f32 %v1869, %v1876
            %s1880 = scalar_lea.vmem %s10, %s785
            %v1881 = vld [vmem:[%s1880] sm:$0x1]
            %s1882 = scalar_lea.vmem %s11, %s785
            %v1883 = vld [vmem:[%s1882] sm:$0x1]
            %v1884 = vsel %vm796, %v1878, 0.0
            %1885 = vadd.xlane.f32.xlu0 %v1884
            %v1886 = vpop.xlane.xlu0 %1885
            %v1887 = vsel %vm796, %v1879, 0.0
            %1888 = vadd.xlane.f32.xlu0 %v1887
            %v1889 = vpop.xlane.xlu0 %1888
            %v1890 = vmul.f32 %v1886, %v803
            %v1891 = vmul.f32 %v1889, %v803
            %v1892 = vsub.f32 %v1878, %v1890
            %v1893 = vsub.f32 %v1879, %v1891
            %v1894 = vmul.f32 %v1892, %v1892
            %v1895 = vmul.f32 %v1893, %v1893
            %v1896 = vsel %vm796, %v1894, 0.0
            %1897 = vadd.xlane.f32.xlu0 %v1896
            %v1898 = vpop.xlane.xlu0 %1897
            %v1899 = vsel %vm796, %v1895, 0.0
            %1900 = vadd.xlane.f32.xlu0 %v1899
            %v1901 = vpop.xlane.xlu0 %1900
            %v1902 = vmul.f32 %v1898, %v803
            %v1903 = vmul.f32 %v1901, %v803
            %v1904 = vadd.f32 %v1902, 1e-05
            %v1905 = vadd.f32 %v1903, 1e-05
            %v1906 = vrsqrt.pop %v1904
            %v1907 = vrsqrt.pop %v1905
            %v1908 = vmul.f32 %v1892, %v1906
            %v1909 = vmul.f32 %v1893, %v1907
            %v1911 = vlaneseq
            %v1912 = vshrl.u32 %v1911, 7
            %v1913 = vsub.s32 0, %v1912
            %v1914 = vrot.slane %v1881, %v1913
            %v1916 = vmul.f32 %v1908, %v1914
            %v1917 = vmul.f32 %v1909, %v1914
            %v1919 = vlaneseq
            %v1920 = vshrl.u32 %v1919, 7
            %v1921 = vsub.s32 0, %v1920
            %v1922 = vrot.slane %v1883, %v1921
            %v1924 = vadd.f32 %v1916, %v1922
            %v1925 = vadd.f32 %v1917, %v1922
            %s1926 = scalar_lea.vmem %s12, %s840
            %v1927 = vld [vmem:[%s1926] sm:$0xff]
            %v1928 = vld [vmem:[%s1926 + $0x8] sm:$0xff]
            %v1929 = vld [vmem:[%s1926 + $0x10] sm:$0xff]
            %v1930 = vld [vmem:[%s1926 + $0x18] sm:$0xff]
            %s1931 = scalar_lea.vmem %s13, %s785
            %v1932 = vld [vmem:[%s1931] sm:$0x1]
            %v1934 = vlaneseq
            %v1935 = vshrl.u32 %v1934, 7
            %v1936 = vsub.s32 0, %v1935
            %v1937 = vrot.slane %v1932, %v1936
            %v1940 = vsel %vm796, %v1924, 0
            %v1943 = vsel %vm796, %v1925, 0
            %1945 = vmatprep.subr.mxu0 0.0
            %1946 = vmatpush1.msra.mxu0 %v1927
            %1947 = vmatprep.subr.mxu0 0.0
            %1948 = vmatpush1.msra.mxu0 %v1928
            %1949 = vmatprep.subr.mxu0 0.0
            %1950 = vmatpush1.msra.mxu0 %v1929
            %1951 = vmatprep.subr.mxu0 0.0
            %1952 = vmatpush1.msra.mxu0 %v1930
            %1953 = vmatprep.subr.mxu0 0.0
            %1954 = vmatpush1.msra.mxu0 0.0
            %1955 = vmatprep.subr.mxu0 0.0
            %1956 = vmatpush1.msra.mxu0 0.0
            %1957 = vmatprep.subr.mxu0 0.0
            %1958 = vmatpush1.msra.mxu0 0.0
            %1959 = vmatprep.subr.mxu0 0.0
            %1960 = vmatpush1.msra.mxu0 0.0
            %1961 = vmatprep.subr.mxu0 0.0
            %1962 = vmatpush1.msra.mxu0 0.0
            %1963 = vmatprep.subr.mxu0 0.0
            %1964 = vmatpush1.msra.mxu0 0.0
            %1965 = vmatprep.subr.mxu0 0.0
            %1966 = vmatpush1.msra.mxu0 0.0
            %1967 = vmatprep.subr.mxu0 0.0
            %1968 = vmatpush1.msra.mxu0 0.0
            %1969 = vmatprep.subr.mxu0 0.0
            %1970 = vmatpush1.msra.mxu0 0.0
            %1971 = vmatprep.subr.mxu0 0.0
            %1972 = vmatpush1.msra.mxu0 0.0
            %1973 = vmatprep.subr.mxu0 0.0
            %1974 = vmatpush1.msra.mxu0 0.0
            %1975 = vmatprep.subr.mxu0 0.0
            %1976 = vmatpush1.msra.mxu0 0.0
            %1977 = vmatprep.subr.mxu0 0.0
            %1978 = vmatpush1.msra.mxu0 0.0
            %1979 = vmatprep.subr.mxu0 0.0
            %1980 = vmatpush1.msra.mxu0 0.0
            %1981 = vmatprep.subr.mxu0 0.0
            %1982 = vmatpush1.msra.mxu0 0.0
            %1983 = vmatprep.subr.mxu0 0.0
            %1984 = vmatpush1.msra.mxu0 0.0
            %1985 = vmatprep.subr.mxu0 0.0
            %1986 = vmatpush1.msra.mxu0 0.0
            %1987 = vmatprep.subr.mxu0 0.0
            %1988 = vmatpush1.msra.mxu0 0.0
            %1989 = vmatprep.subr.mxu0 0.0
            %1990 = vmatpush1.msra.mxu0 0.0
            %1991 = vmatprep.subr.mxu0 0.0
            %1992 = vmatpush1.msra.mxu0 0.0
            %1993 = vmatprep.subr.mxu0 0.0
            %1994 = vmatpush1.msra.mxu0 0.0
            %1995 = vmatprep.subr.mxu0 0.0
            %1996 = vmatpush1.msra.mxu0 0.0
            %1997 = vmatprep.subr.mxu0 0.0
            %1998 = vmatpush1.msra.mxu0 0.0
            %1999 = vmatprep.subr.mxu0 0.0
            %2000 = vmatpush1.msra.mxu0 0.0
            %2001 = vmatprep.subr.mxu0 0.0
            %2002 = vmatpush1.msra.mxu0 0.0
            %2003 = vmatprep.subr.mxu0 0.0
            %2004 = vmatpush1.msra.mxu0 0.0
            %2005 = vmatprep.subr.mxu0 0.0
            %2006 = vmatpush1.msra.mxu0 0.0
            %2007 = vmatprep.subr.mxu0 0.0
            %2008 = vmatpush1.msra.mxu0 0.0
            %2009 = vmatprep.mubr.f32.mxu0 0.0
            %2010 = vmatmul.mubr.f32.gmra.mrb[0].mxu0 %v1940
            %v2011 = vpop.f32.mrb[0].mxu0
            %v2012 = vadd.f32 %v1937, %v2011
            %v2013 = vpop.f32.mrb[0].mxu0
            %2014 = vmatprep.mubr.f32.mxu0 0.0
            %2015 = vmatmul.mubr.f32.gmra.mrb[0].mxu0 %v1943
            %v2016 = vpop.f32.mrb[0].mxu0
            %v2017 = vadd.f32 %v1937, %v2016
            %v2018 = vpop.f32.mrb[0].mxu0
            %2019 = vdwg.mxu0
            %v2020 = vmul.f32 %v2012, 0.5
            %v2021 = vmul.f32 %v2017, 0.5
            %v2022 = vmul.f32 %v2012, %v2012
            %v2023 = vmul.f32 %v2017, %v2017
            %v2024 = vmul.f32 %v2012, %v2022
            %v2025 = vmul.f32 %v2017, %v2023
            %v2026 = vmul.f32 %v2024, 0.044715
            %v2027 = vmul.f32 %v2025, 0.044715
            %v2028 = vadd.f32 %v2012, %v2026
            %v2029 = vadd.f32 %v2017, %v2027
            %v2030 = vmul.f32 %v2028, 0.7978846
            %v2031 = vmul.f32 %v2029, 0.7978846
            %v2032 = vtanh.pop %v2030
            %v2033 = vtanh.pop %v2031
            %v2034 = vadd.f32 %v2032, 1.0
            %v2035 = vadd.f32 %v2033, 1.0
            %v2036 = vmul.f32 %v2020, %v2034
            %v2037 = vmul.f32 %v2021, %v2035
            %s2038 = smul.u32 %s785, 128
            %s2039 = scalar_lea.vmem %s14, %s2038
            %v2040 = vld [vmem:[%s2039] sm:$0xff]
            %v2041 = vld [vmem:[%s2039 + $0x8] sm:$0xff]
            %v2042 = vld [vmem:[%s2039 + $0x10] sm:$0xff]
            %v2043 = vld [vmem:[%s2039 + $0x18] sm:$0xff]
            %v2044 = vld [vmem:[%s2039 + $0x20] sm:$0xff]
            %v2045 = vld [vmem:[%s2039 + $0x28] sm:$0xff]
            %v2046 = vld [vmem:[%s2039 + $0x30] sm:$0xff]
            %v2047 = vld [vmem:[%s2039 + $0x38] sm:$0xff]
            %v2048 = vld [vmem:[%s2039 + $0x40] sm:$0xff]
            %v2049 = vld [vmem:[%s2039 + $0x48] sm:$0xff]
            %v2050 = vld [vmem:[%s2039 + $0x50] sm:$0xff]
            %v2051 = vld [vmem:[%s2039 + $0x58] sm:$0xff]
            %v2052 = vld [vmem:[%s2039 + $0x60] sm:$0xff]
            %v2053 = vld [vmem:[%s2039 + $0x68] sm:$0xff]
            %v2054 = vld [vmem:[%s2039 + $0x70] sm:$0xff]
            %v2055 = vld [vmem:[%s2039 + $0x78] sm:$0xff]
            %2056 = vmatprep.subr.mxu0 0.0
            %2057 = vmatpush1.msra.mxu0 %v2040
            %2058 = vmatprep.subr.mxu0 0.0
            %2059 = vmatpush1.msra.mxu0 %v2041
            %2060 = vmatprep.subr.mxu0 0.0
            %2061 = vmatpush1.msra.mxu0 %v2042
            %2062 = vmatprep.subr.mxu0 0.0
            %2063 = vmatpush1.msra.mxu0 %v2043
            %2064 = vmatprep.subr.mxu0 0.0
            %2065 = vmatpush1.msra.mxu0 %v2044
            %2066 = vmatprep.subr.mxu0 0.0
            %2067 = vmatpush1.msra.mxu0 %v2045
            %2068 = vmatprep.subr.mxu0 0.0
            %2069 = vmatpush1.msra.mxu0 %v2046
            %2070 = vmatprep.subr.mxu0 0.0
            %2071 = vmatpush1.msra.mxu0 %v2047
            %2072 = vmatprep.subr.mxu0 0.0
            %2073 = vmatpush1.msra.mxu0 %v2048
            %2074 = vmatprep.subr.mxu0 0.0
            %2075 = vmatpush1.msra.mxu0 %v2049
            %2076 = vmatprep.subr.mxu0 0.0
            %2077 = vmatpush1.msra.mxu0 %v2050
            %2078 = vmatprep.subr.mxu0 0.0
            %2079 = vmatpush1.msra.mxu0 %v2051
            %2080 = vmatprep.subr.mxu0 0.0
            %2081 = vmatpush1.msra.mxu0 %v2052
            %2082 = vmatprep.subr.mxu0 0.0
            %2083 = vmatpush1.msra.mxu0 %v2053
            %2084 = vmatprep.subr.mxu0 0.0
            %2085 = vmatpush1.msra.mxu0 %v2054
            %2086 = vmatprep.subr.mxu0 0.0
            %2087 = vmatpush1.msra.mxu0 %v2055
            %2088 = vmatprep.subr.mxu0 0.0
            %2089 = vmatpush1.msra.mxu0 0.0
            %2090 = vmatprep.subr.mxu0 0.0
            %2091 = vmatpush1.msra.mxu0 0.0
            %2092 = vmatprep.subr.mxu0 0.0
            %2093 = vmatpush1.msra.mxu0 0.0
            %2094 = vmatprep.subr.mxu0 0.0
            %2095 = vmatpush1.msra.mxu0 0.0
            %2096 = vmatprep.subr.mxu0 0.0
            %2097 = vmatpush1.msra.mxu0 0.0
            %2098 = vmatprep.subr.mxu0 0.0
            %2099 = vmatpush1.msra.mxu0 0.0
            %2100 = vmatprep.subr.mxu0 0.0
            %2101 = vmatpush1.msra.mxu0 0.0
            %2102 = vmatprep.subr.mxu0 0.0
            %2103 = vmatpush1.msra.mxu0 0.0
            %2104 = vmatprep.subr.mxu0 0.0
            %2105 = vmatpush1.msra.mxu0 0.0
            %2106 = vmatprep.subr.mxu0 0.0
            %2107 = vmatpush1.msra.mxu0 0.0
            %2108 = vmatprep.subr.mxu0 0.0
            %2109 = vmatpush1.msra.mxu0 0.0
            %2110 = vmatprep.subr.mxu0 0.0
            %2111 = vmatpush1.msra.mxu0 0.0
            %2112 = vmatprep.subr.mxu0 0.0
            %2113 = vmatpush1.msra.mxu0 0.0
            %2114 = vmatprep.subr.mxu0 0.0
            %2115 = vmatpush1.msra.mxu0 0.0
            %2116 = vmatprep.subr.mxu0 0.0
            %2117 = vmatpush1.msra.mxu0 0.0
            %2118 = vmatprep.subr.mxu0 0.0
            %2119 = vmatpush1.msra.mxu0 0.0
            %2120 = vmatprep.mubr.f32.mxu0 0.0
            %2121 = vmatmul.mubr.f32.gmra.mrb[0].mxu0 %v2036
            %v2122 = vpop.f32.mrb[0].mxu0
            %v2123 = vadd.f32 0.0, %v2122
            %v2124 = vpop.f32.mrb[0].mxu0
            %2125 = vmatprep.mubr.f32.mxu0 0.0
            %2126 = vmatmul.mubr.f32.gmra.mrb[0].mxu0 %v2037
            %v2127 = vpop.f32.mrb[0].mxu0
            %v2128 = vadd.f32 0.0, %v2127
            %v2129 = vpop.f32.mrb[0].mxu0
            %2130 = vdwg.mxu0
            %v2131 = vadd.f32 %v1878, %v2123
            %v2132 = vadd.f32 %v1879, %v2128
            %s2133 = scalar_lea.vmem %s15, %s785
            %v2134 = vld [vmem:[%s2133] sm:$0x1]
            %v2136 = vlaneseq
            %v2137 = vshrl.u32 %v2136, 7
            %v2138 = vsub.s32 0, %v2137
            %v2139 = vrot.slane %v2134, %v2138
            %v2141 = vadd.f32 %v2131, %v2139
            %v2142 = vadd.f32 %v2132, %v2139
          $region116: #{tpu_custom_call.1} parent=108 // loop_footer
            %s789 = sadd.s32 1, %s785
          $region117: #{tpu_custom_call.1} parent=108 // loop_footer_branch
            %784 = sbr.rel target = $region113
          $region118: #{tpu_custom_call.1} parent=108 // loop_exit
            _
          %vm2143 = vcmask 261120
          %v2144 = vsel %vm2143, %v790, 0.0
          %2145 = vadd.xlane.f32.xlu0 %v2144
          %v2146 = vpop.xlane.xlu0 %2145
          %v2147 = vsel %vm2143, %v791, 0.0
          %2148 = vadd.xlane.f32.xlu0 %v2147
          %v2149 = vpop.xlane.xlu0 %2148
          %v2150 = vrcp.pop 32.0
          %v2151 = vmul.f32 %v2146, %v2150
          %v2152 = vmul.f32 %v2149, %v2150
          %v2153 = vsub.f32 %v790, %v2151
          %v2154 = vsub.f32 %v791, %v2152
          %v2155 = vmul.f32 %v2153, %v2153
          %v2156 = vmul.f32 %v2154, %v2154
          %v2157 = vsel %vm2143, %v2155, 0.0
          %2158 = vadd.xlane.f32.xlu0 %v2157
          %v2159 = vpop.xlane.xlu0 %2158
          %v2160 = vsel %vm2143, %v2156, 0.0
          %2161 = vadd.xlane.f32.xlu0 %v2160
          %v2162 = vpop.xlane.xlu0 %2161
          %v2163 = vmul.f32 %v2159, %v2150
          %v2164 = vmul.f32 %v2162, %v2150
          %v2165 = vadd.f32 %v2163, 1e-05
          %v2166 = vadd.f32 %v2164, 1e-05
          %v2167 = vrsqrt.pop %v2165
          %v2168 = vrsqrt.pop %v2166
          %v2169 = vmul.f32 %v2153, %v2167
          %v2170 = vmul.f32 %v2154, %v2168
          %v2172 = vlaneseq
          %v2173 = vshrl.u32 %v2172, 7
          %v2174 = vsub.s32 0, %v2173
          %v2175 = vrot.slane %v770, %v2174
          %v2177 = vmul.f32 %v2169, %v2175
          %v2178 = vmul.f32 %v2170, %v2175
          %v2180 = vlaneseq
          %v2181 = vshrl.u32 %v2180, 7
          %v2182 = vsub.s32 0, %v2181
          %v2183 = vrot.slane %v771, %v2182
          %v2185 = vadd.f32 %v2177, %v2183
          %v2186 = vadd.f32 %v2178, %v2183
          %v2188 = vlaneseq
          %v2189 = vshrl.u32 %v2188, 7
          %v2190 = vsub.s32 0, %v2189
          %v2191 = vrot.slane %v772, %v2190
          %v2193 = vmul.f32 %v2185, %v2191
          %v2194 = vmul.f32 %v2186, %v2191
          %v2195 = vsel %vm2143, %v2193, 0.0
          %2196 = vadd.xlane.f32.xlu0 %v2195
          %v2197 = vpop.xlane.xlu0 %2196
          %v2198 = vsel %vm2143, %v2194, 0.0
          %2199 = vadd.xlane.f32.xlu0 %v2198
          %v2200 = vpop.xlane.xlu0 %2199
          %v2201 = vstv %s773
          %v2202 = vadd.f32 %v2197, %v2201
          %v2203 = vadd.f32 %v2200, %v2201
          %v2206 = vlaneseq
          %v2207 = vshrl.u32 %v2206, 7
          %v2208 = vsub.s32 %v661, %v2207
          %v2209 = vrot.slane %v2202, %v2208
          %v2210 = vadd.s32 %v661, 4294967288
          %v2211 = vlaneseq
          %v2212 = vshrl.u32 %v2211, 7
          %v2213 = vsub.s32 %v2210, %v2212
          %v2214 = vrot.slane %v2203, %v2213
          %vm2215 = vcmask 130112
          %v2216 = vsel %vm2215, %v2214, %v2209
          %s2218 = scalar_lea.vmem %s651, %s775 [#allocation4]
          %vm2219 = vcmask 122880
          %2220 = vst.msk [vmem:[%s2218] sm:$0x1] %vm2219, %v2216
        $region109: #{tpu_custom_call.1} parent=103 // loop_footer
          %s779 = sadd.s32 1, %s775
        $region110: #{tpu_custom_call.1} parent=103 // loop_footer_branch
          %774 = sbr.rel target = $region106
        $region111: #{tpu_custom_call.1} parent=103 // loop_exit
          _
        %s2221 = sand.u32 %s491, 1
        %s2222 = scalar_lea.sflag [#allocation5], %s2221
        %s2223 = sand.u32 %s491, 1
        %s2224 = smul.addr %s2223, 2
        %s2225 = scalar_lea.vmem [#allocation4], %s2224
        // Predicated region
        $region119: #{tpu_custom_call.1} parent=103 // pred_check
          %p2226 = pneg %p501
        $region120: #{tpu_custom_call.1} parent=103 // pred_check_branch
          %2228 = sbr.rel (%p2226) target = $region122
        $region121: #{tpu_custom_call.1} parent=103 // pred_region
          %s2230 = ssub.s32 32, 32
          %2231 = vsyncadd %s2222, %s2230
          %s2232 = smul.addr %s37, 32
          %s2233 = scalar_lea.hbm %s21, %s2232
          %s2235 = sshll.u32 %s2225, 4
          %s2236 = int_to_ptr.vmem [resolvable:$true] %s2235
          %2238 = dma.vmem_to_hbm [thread:$0]  %s2236, 32, %s2233, %s2222
        $region122: #{tpu_custom_call.1} parent=103 // pred_fallthru
          _
      $region104: #{tpu_custom_call.1} parent=5 // pred_fallthru
        _
      %p2239 = scmp.le.s32.totalorder 2, %s32
      // Predicated region
      $region123: #{tpu_custom_call.1} parent=5 // pred_check
        %p2240 = pneg %p2239
      $region124: #{tpu_custom_call.1} parent=5 // pred_check_branch
        %2242 = sbr.rel (%p2240) target = $region126
      $region125: #{tpu_custom_call.1} parent=5 // pred_region
        %s2243 = ssub.s32 %s32, 2
        // Predicated region
        $region127: #{tpu_custom_call.1} parent=125 // pred_check
          %p2244 = pneg %p507
        $region128: #{tpu_custom_call.1} parent=125 // pred_check_branch
          %2246 = sbr.rel (%p2244) target = $region130
        $region129: #{tpu_custom_call.1} parent=125 // pred_region
          %s2247 = sand.u32 %s492, 1
          %s2248 = scalar_lea.sflag [#allocation5], %s2247
          %s2249 = sand.u32 %s492, 1
          %s2250 = smul.addr %s2249, 2
          %s2251 = scalar_lea.vmem [#allocation4], %s2250
          %2252 = dma.done %s2248, 32
        $region130: #{tpu_custom_call.1} parent=125 // pred_fallthru
          _
      $region126: #{tpu_custom_call.1} parent=5 // pred_fallthru
        _
    $region6: #{tpu_custom_call.1} parent=1 // loop_footer
      %s36 = sadd.s32 1, %s32
    $region7: #{tpu_custom_call.1} parent=1 // loop_footer_branch
      %31 = sbr.rel target = $region3
    $region8: #{tpu_custom_call.1} parent=1 // loop_exit
      _
    %2253 = vsyncpa [#allocation5], 1
    %s2254 = scalar_lea.sflag [#allocation5], 1
    %2255 = vsyncpa %s2254, 1

</llo_original>
